<compile_context>
chip_gen: v7x
topology: tpu7x:2x2x1
jax: 0.10.0
libtpu: 0.0.40
codegen_flags: <defaults>
</compile_context>

<pallas_src>
import jax
import jax.numpy as jnp
from jax.experimental import pallas as pl
from jax.experimental.pallas import tpu as pltpu


def _make_kernel(H, WP, msub, nsub):
    """Build the BasicBlock kernel for one (B_TILE*H, W*C) image slab.

    x_ref  : (B_TILE*H, W*C)   f32  lane-dense channels-last rows, B_TILE images
    t1_ref : (W*C, 3*W*P)      bf16 conv1 weights [T0|T1|T2], BN1 scale folded
    b1_ref : (1, W*P)          f32  BN1 bias tiled to the lane layout
    t2_ref : (W*P, 3*W*P)      bf16 conv2 weights [T0|T1|T2], BN2 scale folded
    b2_ref : (1, W*P)          f32
    out_ref: (B_TILE*H, W*P)   f32
    """

    def kernel(x_ref, t1_ref, b1_ref, t2_ref, b2_ref, out_ref):
        # 0/1 row-shift matrices (built once per step, reused for every sub-chunk
        # and both convs).  (s_dn @ y)[r] = y[r-1] unless r is the first row of
        # its image; (s_up @ y)[r] = y[r+1] unless r is the last row of its image.
        r = jax.lax.broadcasted_iota(jnp.int32, (msub, msub), 0)
        c = jax.lax.broadcasted_iota(jnp.int32, (msub, msub), 1)
        h = r % H                                             # within-image row
        s_dn = jnp.where((r == c + 1) & (h != 0), 1.0, 0.0)
        s_up = jnp.where((r == c - 1) & (h != H - 1), 1.0, 0.0)

        def conv(x_bf16, t_ref, b_ref):
            # One MXU dot per conv: K = W*C(in), N = 3*W*P, f32 accumulation.
            y = jnp.dot(x_bf16, t_ref[...], preferred_element_type=jnp.float32)
            y0 = y[:, 0:WP]            # contribution of the row above
            y1 = y[:, WP:2 * WP]       # same-row contribution
            y2 = y[:, 2 * WP:3 * WP]   # contribution of the row below
            out = y1 + b_ref[...]      # bias seeds the accumulator
            out = out + jnp.dot(s_dn, y0, preferred_element_type=jnp.float32)
            out = out + jnp.dot(s_up, y2, preferred_element_type=jnp.float32)
            return out

        for s in range(nsub):          # whole images per sub-chunk -> shifts stay local
            r0 = s * msub
            x_rows = x_ref[r0:r0 + msub, :]                       # (msub, W*C) f32
            o1 = jnp.maximum(
                conv(x_rows.astype(jnp.bfloat16), t1_ref, b1_ref), 0.0)
            o2 = conv(o1.astype(jnp.bfloat16), t2_ref, b2_ref)
            # bn2 bias already added; residual reuses the loaded input rows.
            out_ref[r0:r0 + msub, :] = jnp.maximum(o2 + x_rows, 0.0)

    return kernel


def _lower_conv3x3_merged(w_hwio, scale, W):
    """Lower HWIO 3x3 conv weights (per-output-channel `scale` folded in) to the
    lane-concatenated block-Toeplitz matrix [T0 | T1 | T2] of shape (W*C, 3*W*P),
    in bf16, such that for an image slab x of shape (H, W*C) (row h = flattened
    NHWC row) and Y = x @ [T0|T1|T2]:
        conv_out[h] = Y0[h-1] + Y1[h] + Y2[h+1]      (out-of-range rows = 0)
    which is SAME-padded, stride-1 3x3 cross-correlation (== nn.Conv2d)."""
    _, _, C, P = w_hwio.shape
    w = (w_hwio * scale[None, None, None, :]).astype(jnp.float32)
    i = jnp.arange(W)[:, None]          # input-pixel column  w_in
    o = jnp.arange(W)[None, :]          # output-pixel column w_out
    # E[dx, w_in, w_out] = 1 iff w_in == w_out + dx - 1 (dropped taps == SAME pad in W).
    E = jnp.stack([(i == o + dx - 1).astype(jnp.float32) for dx in range(3)])
    T = jnp.einsum('xio,yxcp->yicop', E, w).reshape(3, W * C, W * P)
    return jnp.transpose(T, (1, 0, 2)).reshape(W * C, 3 * W * P).astype(jnp.bfloat16)


@jax.jit
def basic_block_forward(x_nchw, w1, s1, b1, w2, s2, b2):
    """x_nchw: (N, C, H, W) f32; w*: (3,3,Cin,P) HWIO; s*/b*: (P,) folded BN."""
    N, C, H, W = x_nchw.shape
    P = w1.shape[-1]
    assert C == P, "stride=1 with no downsample requires inplanes == planes"
    WC, WP = W * C, W * P
    assert WC % 128 == 0 and WP % 128 == 0, "lane-dense layout needs W*C, W*P % 128 == 0"

    # Batch tile per grid step (keep the grid >= 2 steps where possible for v7x's
    # two TensorCores) and rows per MXU dot (cap live accumulators).
    b_tile = min(N, 8)
    assert N % b_tile == 0, "demo wrapper assumes batch divisible by the batch tile"
    imgs_per_dot = min(b_tile, max(1, 64 // H))
    while b_tile % imgs_per_dot:
        imgs_per_dot -= 1
    msub = imgs_per_dot * H
    nsub = b_tile // imgs_per_dot
    assert (b_tile * H) % 8 == 0 and msub % 8 == 0

    # NCHW -> NHWC -> (N*H, W*C): lane-dense 2-D slab, one sublane row per image row.
    x2d = jnp.transpose(x_nchw, (0, 2, 3, 1)).reshape(N * H, WC)

    t1 = _lower_conv3x3_merged(w1, s1, W)          # (W*C, 3*W*P) bf16
    t2 = _lower_conv3x3_merged(w2, s2, W)          # (W*P, 3*W*P) bf16
    b1r = jnp.tile(b1, W).reshape(1, WP)           # channel-fastest lane layout
    b2r = jnp.tile(b2, W).reshape(1, WP)

    kernel = _make_kernel(H, WP, msub, nsub)

    out2d = pl.pallas_call(
        kernel,
        out_shape=jax.ShapeDtypeStruct((N * H, WP), jnp.float32),
        grid_spec=pltpu.PrefetchScalarGridSpec(
            num_scalar_prefetch=0,
            grid=(N // b_tile,),
            in_specs=[
                pl.BlockSpec((b_tile * H, WC), lambda n: (n, 0)),
                pl.BlockSpec((WC, 3 * WP), lambda n: (0, 0)),
                pl.BlockSpec((1, WP), lambda n: (0, 0)),
                pl.BlockSpec((WP, 3 * WP), lambda n: (0, 0)),
                pl.BlockSpec((1, WP), lambda n: (0, 0)),
            ],
            out_specs=pl.BlockSpec((b_tile * H, WP), lambda n: (n, 0)),
        ),
        compiler_params=pltpu.CompilerParams(
            dimension_semantics=("parallel",),
            vmem_limit_bytes=32 * 1024 * 1024),
    )(x2d, t1, b1r, t2, b2r)

    # (N*H, W*P) -> (N, H, W, P) -> NCHW
    return jnp.transpose(out2d.reshape(N, H, W, P), (0, 3, 1, 2))


# ----------------------- pure-XLA reference (f32) -----------------------
def _conv3x3_ref(x_nhwc, w_hwio):
    return jax.lax.conv_general_dilated(
        x_nhwc, w_hwio, window_strides=(1, 1), padding="SAME",
        dimension_numbers=("NHWC", "HWIO", "NHWC"))


def _ref_forward(x_nchw, w1, s1, b1, w2, s2, b2):
    x = jnp.transpose(x_nchw, (0, 2, 3, 1))
    o = jnp.maximum(_conv3x3_ref(x, w1) * s1 + b1, 0.0)
    o = _conv3x3_ref(o, w2) * s2 + b2
    o = jnp.maximum(o + x, 0.0)
    return jnp.transpose(o, (0, 3, 1, 2))


if __name__ == "__main__":
    # Small BasicBlock: inplanes = planes = 8, stride = 1, downsample = None.
    # W * C = 16 * 8 = 128 -> every kernel block is lane-dense; batch 16 gives a
    # 2-step grid with 8 images (M = 128 rows) per step, 64 rows per MXU dot.
    N, C, H, W = 16, 8, 16, 16
    P = C
    eps = 1e-5

    key = jax.random.PRNGKey(0)
    kx, kw1, kw2, kg1, kb1, km1, kv1, kg2, kb2, km2, kv2 = jax.random.split(key, 11)

    x = jax.random.normal(kx, (N, C, H, W), jnp.float32)

    # Conv weights stored HWIO (kernel layout).
    w1 = 0.1 * jax.random.normal(kw1, (3, 3, C, P), jnp.float32)
    w2 = 0.1 * jax.random.normal(kw2, (3, 3, P, P), jnp.float32)

    # BatchNorm (inference) parameters folded into per-channel scale/bias.
    def fold_bn(kg, kb, km, kv):
        gamma = 1.0 + 0.1 * jax.random.normal(kg, (P,), jnp.float32)
        beta = 0.1 * jax.random.normal(kb, (P,), jnp.float32)
        mean = 0.1 * jax.random.normal(km, (P,), jnp.float32)
        var = jnp.abs(jax.random.normal(kv, (P,), jnp.float32)) + 0.5
        scale = gamma / jnp.sqrt(var + eps)
        bias = beta - mean * scale
        return scale, bias

    s1, b1 = fold_bn(kg1, kb1, km1, kv1)
    s2, b2 = fold_bn(kg2, kb2, km2, kv2)

    out = basic_block_forward(x, w1, s1, b1, w2, s2, b2)
    out = jax.block_until_ready(out)

    ref = _ref_forward(x, w1, s1, b1, w2, s2, b2)
    assert out.shape == (N, P, H, W)
    # bf16 MXU operands -> relaxed tolerance vs the f32 XLA reference.
    assert jnp.allclose(out, ref, atol=3e-2, rtol=3e-2), "mismatch vs XLA reference"

    print("KERNEL_OK")
</pallas_src>

<mosaic_0001>
module attributes {stable_mosaic.version = 11 : i64} {
  func.func @kernel(%arg0: i32, %arg1: memref<128x128xf32, #tpu.memory_space<vmem>>, %arg2: memref<128x384xbf16, #tpu.memory_space<vmem>>, %arg3: memref<1x128xf32, #tpu.memory_space<vmem>>, %arg4: memref<128x384xbf16, #tpu.memory_space<vmem>>, %arg5: memref<1x128xf32, #tpu.memory_space<vmem>>, %arg6: memref<128x128xf32, #tpu.memory_space<vmem>>) attributes {dimension_semantics = [#tpu.dimension_semantics<parallel>], iteration_bounds = array<i64: 2>, scalar_prefetch = 0 : i64, scratch_operands = 0 : i64, tpu.core_type = #tpu.core_type<tc>, window_params = [{transform_indices = @transform_0, window_bounds = array<i64: 128, 128>}, {pipeline_mode = #tpu.pipeline_mode<synchronous>, transform_indices = @transform_1, window_bounds = array<i64: 128, 384>}, {pipeline_mode = #tpu.pipeline_mode<synchronous>, transform_indices = @transform_2, window_bounds = array<i64: 1, 128>}, {pipeline_mode = #tpu.pipeline_mode<synchronous>, transform_indices = @transform_3, window_bounds = array<i64: 128, 384>}, {pipeline_mode = #tpu.pipeline_mode<synchronous>, transform_indices = @transform_4, window_bounds = array<i64: 1, 128>}, {transform_indices = @transform_5, window_bounds = array<i64: 128, 128>}]} {
    %0 = tpu.iota {dimensions = array<i32: 0>} : vector<64x64xi32>
    %1 = tpu.iota {dimensions = array<i32: 1>} : vector<64x64xi32>
    %c16_i32 = arith.constant 16 : i32
    %c0_i32 = arith.constant 0 : i32
    %2 = arith.cmpi eq, %c16_i32, %c0_i32 : i32
    %c1_i32 = arith.constant 1 : i32
    %3 = arith.select %2, %c1_i32, %c16_i32 : i32
    %4 = vector.broadcast %3 : i32 to vector<64x64xi32>
    %5 = arith.remsi %0, %4 : vector<64x64xi32>
    %c0_i32_0 = arith.constant 0 : i32
    %6 = vector.broadcast %c0_i32_0 : i32 to vector<64x64xi32>
    %7 = arith.cmpi ne, %5, %6 : vector<64x64xi32>
    %c0_i32_1 = arith.constant 0 : i32
    %8 = vector.broadcast %c0_i32_1 : i32 to vector<64x64xi32>
    %9 = arith.cmpi slt, %5, %8 : vector<64x64xi32>
    %c0_i32_2 = arith.constant 0 : i32
    %10 = arith.cmpi slt, %3, %c0_i32_2 : i32
    %11 = vector.broadcast %10 : i1 to vector<64x64xi1>
    %12 = vector.broadcast %11 : vector<64x64xi1> to vector<64x64xi1>
    %13 = arith.xori %9, %12 : vector<64x64xi1>
    %14 = arith.andi %13, %7 : vector<64x64xi1>
    %15 = vector.broadcast %3 : i32 to vector<64x64xi32>
    %16 = arith.addi %5, %15 : vector<64x64xi32>
    %17 = arith.select %14, %16, %5 : vector<64x64xi1>, vector<64x64xi32>
    %c1_i32_3 = arith.constant 1 : i32
    %18 = vector.broadcast %c1_i32_3 : i32 to vector<64x64xi32>
    %19 = arith.addi %1, %18 : vector<64x64xi32>
    %20 = arith.cmpi eq, %0, %19 : vector<64x64xi32>
    %c0_i32_4 = arith.constant 0 : i32
    %21 = vector.broadcast %c0_i32_4 : i32 to vector<64x64xi32>
    %22 = arith.cmpi ne, %17, %21 : vector<64x64xi32>
    %23 = arith.andi %20, %22 : vector<64x64xi1>
    %cst = arith.constant 1.000000e+00 : f32
    %cst_5 = arith.constant 0.000000e+00 : f32
    %24 = vector.broadcast %cst : f32 to vector<64x64xf32>
    %25 = vector.broadcast %cst_5 : f32 to vector<64x64xf32>
    %26 = arith.select %23, %24, %25 : vector<64x64xi1>, vector<64x64xf32>
    %c1_i32_6 = arith.constant 1 : i32
    %27 = vector.broadcast %c1_i32_6 : i32 to vector<64x64xi32>
    %28 = arith.subi %1, %27 : vector<64x64xi32>
    %29 = arith.cmpi eq, %0, %28 : vector<64x64xi32>
    %c15_i32 = arith.constant 15 : i32
    %30 = vector.broadcast %c15_i32 : i32 to vector<64x64xi32>
    %31 = arith.cmpi ne, %17, %30 : vector<64x64xi32>
    %32 = arith.andi %29, %31 : vector<64x64xi1>
    %cst_7 = arith.constant 1.000000e+00 : f32
    %cst_8 = arith.constant 0.000000e+00 : f32
    %33 = vector.broadcast %cst_7 : f32 to vector<64x64xf32>
    %34 = vector.broadcast %cst_8 : f32 to vector<64x64xf32>
    %35 = arith.select %32, %33, %34 : vector<64x64xi1>, vector<64x64xf32>
    %c0 = arith.constant 0 : index
    %c0_9 = arith.constant 0 : index
    %36 = vector.load %arg1[%c0, %c0_9] : memref<128x128xf32, #tpu.memory_space<vmem>>, vector<64x128xf32>
    %37 = arith.truncf %36 : vector<64x128xf32> to vector<64x128xbf16>
    %c0_10 = arith.constant 0 : index
    %c0_11 = arith.constant 0 : index
    %38 = vector.load %arg2[%c0_10, %c0_11] : memref<128x384xbf16, #tpu.memory_space<vmem>>, vector<128x384xbf16>
    %cst_12 = arith.constant dense<0.000000e+00> : vector<64x384xf32>
    %39 = tpu.matmul %37, %38, %cst_12 {dimension_numbers = #tpu.dot_dimension_numbers<[1], [0], [0], [1], [0, 0, 1, 1], [], []>} : vector<64x128xbf16>, vector<128x384xbf16>, vector<64x384xf32> -> vector<64x384xf32>
    %40 = vector.extract_strided_slice %39 {offsets = [0, 0], sizes = [64, 128], strides = [1, 1]} : vector<64x384xf32> to vector<64x128xf32>
    %41 = vector.extract_strided_slice %39 {offsets = [0, 128], sizes = [64, 128], strides = [1, 1]} : vector<64x384xf32> to vector<64x128xf32>
    %42 = vector.extract_strided_slice %39 {offsets = [0, 256], sizes = [64, 128], strides = [1, 1]} : vector<64x384xf32> to vector<64x128xf32>
    %c0_13 = arith.constant 0 : index
    %c0_14 = arith.constant 0 : index
    %43 = vector.load %arg3[%c0_13, %c0_14] : memref<1x128xf32, #tpu.memory_space<vmem>>, vector<1x128xf32>
    %44 = vector.broadcast %43 : vector<1x128xf32> to vector<64x128xf32>
    %45 = arith.addf %41, %44 : vector<64x128xf32>
    %cst_15 = arith.constant dense<0.000000e+00> : vector<64x128xf32>
    %46 = tpu.matmul %26, %40, %cst_15 {dimension_numbers = #tpu.dot_dimension_numbers<[1], [0], [0], [1], [0, 0, 1, 1], [], []>} : vector<64x64xf32>, vector<64x128xf32>, vector<64x128xf32> -> vector<64x128xf32>
    %47 = arith.addf %45, %46 : vector<64x128xf32>
    %cst_16 = arith.constant dense<0.000000e+00> : vector<64x128xf32>
    %48 = tpu.matmul %35, %42, %cst_16 {dimension_numbers = #tpu.dot_dimension_numbers<[1], [0], [0], [1], [0, 0, 1, 1], [], []>} : vector<64x64xf32>, vector<64x128xf32>, vector<64x128xf32> -> vector<64x128xf32>
    %49 = arith.addf %47, %48 : vector<64x128xf32>
    %cst_17 = arith.constant 0.000000e+00 : f32
    %50 = vector.broadcast %cst_17 : f32 to vector<64x128xf32>
    %51 = arith.maximumf %49, %50 : vector<64x128xf32>
    %52 = arith.truncf %51 : vector<64x128xf32> to vector<64x128xbf16>
    %c0_18 = arith.constant 0 : index
    %c0_19 = arith.constant 0 : index
    %53 = vector.load %arg4[%c0_18, %c0_19] : memref<128x384xbf16, #tpu.memory_space<vmem>>, vector<128x384xbf16>
    %cst_20 = arith.constant dense<0.000000e+00> : vector<64x384xf32>
    %54 = tpu.matmul %52, %53, %cst_20 {dimension_numbers = #tpu.dot_dimension_numbers<[1], [0], [0], [1], [0, 0, 1, 1], [], []>} : vector<64x128xbf16>, vector<128x384xbf16>, vector<64x384xf32> -> vector<64x384xf32>
    %55 = vector.extract_strided_slice %54 {offsets = [0, 0], sizes = [64, 128], strides = [1, 1]} : vector<64x384xf32> to vector<64x128xf32>
    %56 = vector.extract_strided_slice %54 {offsets = [0, 128], sizes = [64, 128], strides = [1, 1]} : vector<64x384xf32> to vector<64x128xf32>
    %57 = vector.extract_strided_slice %54 {offsets = [0, 256], sizes = [64, 128], strides = [1, 1]} : vector<64x384xf32> to vector<64x128xf32>
    %c0_21 = arith.constant 0 : index
    %c0_22 = arith.constant 0 : index
    %58 = vector.load %arg5[%c0_21, %c0_22] : memref<1x128xf32, #tpu.memory_space<vmem>>, vector<1x128xf32>
    %59 = vector.broadcast %58 : vector<1x128xf32> to vector<64x128xf32>
    %60 = arith.addf %56, %59 : vector<64x128xf32>
    %cst_23 = arith.constant dense<0.000000e+00> : vector<64x128xf32>
    %61 = tpu.matmul %26, %55, %cst_23 {dimension_numbers = #tpu.dot_dimension_numbers<[1], [0], [0], [1], [0, 0, 1, 1], [], []>} : vector<64x64xf32>, vector<64x128xf32>, vector<64x128xf32> -> vector<64x128xf32>
    %62 = arith.addf %60, %61 : vector<64x128xf32>
    %cst_24 = arith.constant dense<0.000000e+00> : vector<64x128xf32>
    %63 = tpu.matmul %35, %57, %cst_24 {dimension_numbers = #tpu.dot_dimension_numbers<[1], [0], [0], [1], [0, 0, 1, 1], [], []>} : vector<64x64xf32>, vector<64x128xf32>, vector<64x128xf32> -> vector<64x128xf32>
    %64 = arith.addf %62, %63 : vector<64x128xf32>
    %65 = arith.addf %64, %36 : vector<64x128xf32>
    %cst_25 = arith.constant 0.000000e+00 : f32
    %66 = vector.broadcast %cst_25 : f32 to vector<64x128xf32>
    %67 = arith.maximumf %65, %66 : vector<64x128xf32>
    %c0_26 = arith.constant 0 : index
    %c0_27 = arith.constant 0 : index
    %68 = vector.load %arg6[%c0_26, %c0_27] : memref<128x128xf32, #tpu.memory_space<vmem>>, vector<64x128xf32>
    tpu.vector_store %arg6[%c0_26, %c0_27], %67 {strides = array<i32>} : memref<128x128xf32, #tpu.memory_space<vmem>>, vector<64x128xf32>,
    %c64 = arith.constant 64 : index
    %c0_28 = arith.constant 0 : index
    %69 = vector.load %arg1[%c64, %c0_28] : memref<128x128xf32, #tpu.memory_space<vmem>>, vector<64x128xf32>
    %70 = arith.truncf %69 : vector<64x128xf32> to vector<64x128xbf16>
    %c0_29 = arith.constant 0 : index
    %c0_30 = arith.constant 0 : index
    %71 = vector.load %arg2[%c0_29, %c0_30] : memref<128x384xbf16, #tpu.memory_space<vmem>>, vector<128x384xbf16>
    %cst_31 = arith.constant dense<0.000000e+00> : vector<64x384xf32>
    %72 = tpu.matmul %70, %71, %cst_31 {dimension_numbers = #tpu.dot_dimension_numbers<[1], [0], [0], [1], [0, 0, 1, 1], [], []>} : vector<64x128xbf16>, vector<128x384xbf16>, vector<64x384xf32> -> vector<64x384xf32>
    %73 = vector.extract_strided_slice %72 {offsets = [0, 0], sizes = [64, 128], strides = [1, 1]} : vector<64x384xf32> to vector<64x128xf32>
    %74 = vector.extract_strided_slice %72 {offsets = [0, 128], sizes = [64, 128], strides = [1, 1]} : vector<64x384xf32> to vector<64x128xf32>
    %75 = vector.extract_strided_slice %72 {offsets = [0, 256], sizes = [64, 128], strides = [1, 1]} : vector<64x384xf32> to vector<64x128xf32>
    %c0_32 = arith.constant 0 : index
    %c0_33 = arith.constant 0 : index
    %76 = vector.load %arg3[%c0_32, %c0_33] : memref<1x128xf32, #tpu.memory_space<vmem>>, vector<1x128xf32>
    %77 = vector.broadcast %76 : vector<1x128xf32> to vector<64x128xf32>
    %78 = arith.addf %74, %77 : vector<64x128xf32>
    %cst_34 = arith.constant dense<0.000000e+00> : vector<64x128xf32>
    %79 = tpu.matmul %26, %73, %cst_34 {dimension_numbers = #tpu.dot_dimension_numbers<[1], [0], [0], [1], [0, 0, 1, 1], [], []>} : vector<64x64xf32>, vector<64x128xf32>, vector<64x128xf32> -> vector<64x128xf32>
    %80 = arith.addf %78, %79 : vector<64x128xf32>
    %cst_35 = arith.constant dense<0.000000e+00> : vector<64x128xf32>
    %81 = tpu.matmul %35, %75, %cst_35 {dimension_numbers = #tpu.dot_dimension_numbers<[1], [0], [0], [1], [0, 0, 1, 1], [], []>} : vector<64x64xf32>, vector<64x128xf32>, vector<64x128xf32> -> vector<64x128xf32>
    %82 = arith.addf %80, %81 : vector<64x128xf32>
    %cst_36 = arith.constant 0.000000e+00 : f32
    %83 = vector.broadcast %cst_36 : f32 to vector<64x128xf32>
    %84 = arith.maximumf %82, %83 : vector<64x128xf32>
    %85 = arith.truncf %84 : vector<64x128xf32> to vector<64x128xbf16>
    %c0_37 = arith.constant 0 : index
    %c0_38 = arith.constant 0 : index
    %86 = vector.load %arg4[%c0_37, %c0_38] : memref<128x384xbf16, #tpu.memory_space<vmem>>, vector<128x384xbf16>
    %cst_39 = arith.constant dense<0.000000e+00> : vector<64x384xf32>
    %87 = tpu.matmul %85, %86, %cst_39 {dimension_numbers = #tpu.dot_dimension_numbers<[1], [0], [0], [1], [0, 0, 1, 1], [], []>} : vector<64x128xbf16>, vector<128x384xbf16>, vector<64x384xf32> -> vector<64x384xf32>
    %88 = vector.extract_strided_slice %87 {offsets = [0, 0], sizes = [64, 128], strides = [1, 1]} : vector<64x384xf32> to vector<64x128xf32>
    %89 = vector.extract_strided_slice %87 {offsets = [0, 128], sizes = [64, 128], strides = [1, 1]} : vector<64x384xf32> to vector<64x128xf32>
    %90 = vector.extract_strided_slice %87 {offsets = [0, 256], sizes = [64, 128], strides = [1, 1]} : vector<64x384xf32> to vector<64x128xf32>
    %c0_40 = arith.constant 0 : index
    %c0_41 = arith.constant 0 : index
    %91 = vector.load %arg5[%c0_40, %c0_41] : memref<1x128xf32, #tpu.memory_space<vmem>>, vector<1x128xf32>
    %92 = vector.broadcast %91 : vector<1x128xf32> to vector<64x128xf32>
    %93 = arith.addf %89, %92 : vector<64x128xf32>
    %cst_42 = arith.constant dense<0.000000e+00> : vector<64x128xf32>
    %94 = tpu.matmul %26, %88, %cst_42 {dimension_numbers = #tpu.dot_dimension_numbers<[1], [0], [0], [1], [0, 0, 1, 1], [], []>} : vector<64x64xf32>, vector<64x128xf32>, vector<64x128xf32> -> vector<64x128xf32>
    %95 = arith.addf %93, %94 : vector<64x128xf32>
    %cst_43 = arith.constant dense<0.000000e+00> : vector<64x128xf32>
    %96 = tpu.matmul %35, %90, %cst_43 {dimension_numbers = #tpu.dot_dimension_numbers<[1], [0], [0], [1], [0, 0, 1, 1], [], []>} : vector<64x64xf32>, vector<64x128xf32>, vector<64x128xf32> -> vector<64x128xf32>
    %97 = arith.addf %95, %96 : vector<64x128xf32>
    %98 = arith.addf %97, %69 : vector<64x128xf32>
    %cst_44 = arith.constant 0.000000e+00 : f32
    %99 = vector.broadcast %cst_44 : f32 to vector<64x128xf32>
    %100 = arith.maximumf %98, %99 : vector<64x128xf32>
    %c64_45 = arith.constant 64 : index
    %c0_46 = arith.constant 0 : index
    %101 = vector.load %arg6[%c64_45, %c0_46] : memref<128x128xf32, #tpu.memory_space<vmem>>, vector<64x128xf32>
    tpu.vector_store %arg6[%c64_45, %c0_46], %100 {strides = array<i32>} : memref<128x128xf32, #tpu.memory_space<vmem>>, vector<64x128xf32>,
    return
  }
  func.func @transform_0(%arg0: i32) -> (i32, i32) {
    %c0_i32 = arith.constant 0 : i32
    %c0_i32_0 = arith.constant 0 : i32
    return %arg0, %c0_i32 : i32, i32
  }
  func.func @transform_1(%arg0: i32) -> (i32, i32) {
    %c0_i32 = arith.constant 0 : i32
    %c0_i32_0 = arith.constant 0 : i32
    %c0_i32_1 = arith.constant 0 : i32
    return %c0_i32, %c0_i32_0 : i32, i32
  }
  func.func @transform_2(%arg0: i32) -> (i32, i32) {
    %c0_i32 = arith.constant 0 : i32
    %c0_i32_0 = arith.constant 0 : i32
    %c0_i32_1 = arith.constant 0 : i32
    return %c0_i32, %c0_i32_0 : i32, i32
  }
  func.func @transform_3(%arg0: i32) -> (i32, i32) {
    %c0_i32 = arith.constant 0 : i32
    %c0_i32_0 = arith.constant 0 : i32
    %c0_i32_1 = arith.constant 0 : i32
    return %c0_i32, %c0_i32_0 : i32, i32
  }
  func.func @transform_4(%arg0: i32) -> (i32, i32) {
    %c0_i32 = arith.constant 0 : i32
    %c0_i32_0 = arith.constant 0 : i32
    %c0_i32_1 = arith.constant 0 : i32
    return %c0_i32, %c0_i32_0 : i32, i32
  }
  func.func @transform_5(%arg0: i32) -> (i32, i32) {
    %c0_i32 = arith.constant 0 : i32
    %c0_i32_0 = arith.constant 0 : i32
    return %arg0, %c0_i32 : i32, i32
  }
}

</mosaic_0001>

<llo_original>
// kernel: tile.13
$region0: #{tile.13}
  #allocation0 [shape = 's32[1]{0}', space=sflag, size = 0x4, scoped, tag = 'scoped memory for tile.13']
  %s0 = inlined_call_operand.vmem [shape: f32[8], index: 0, kind: input, shape index: {}]
  %s1 = inlined_call_operand.vmem [shape: f32[16,8], index: 1, kind: output, shape index: {}]
  // Predicated region
  $region2: #{tile.13} parent=0 // pred_check
    _
  $region3: #{tile.13} parent=0 // pred_check_branch
    %3 = sbr.rel (0) target = $region5
  $region4: #{tile.13} parent=0 // pred_region
    _
  $region5: #{tile.13} parent=0 // pred_fallthru
    _
  %v4 = vld [vmem:[%s0] ss:$0 sm:$0xff]
  %5 = vst [vmem:[%s1] sm:$0xff] %v4
  %s6 = scalar_lea.vmem %s1, 8
  %7 = vst [vmem:[%s6] sm:$0xff] %v4

// kernel: tile.14
$region0: #{tile.14}
  %s0 = inlined_call_operand.vmem [shape: f32[16,8], index: 0, kind: input, shape index: {}]
  %s1 = inlined_call_operand.vmem [shape: f32[1,128], index: 1, kind: output, shape index: {}]
  $region1: #{tile.14} parent=0
    #allocation0 [shape = 'u8[4096]{0}', space=vmem, size = 0x1000, scoped, tag = 'scoped mem for output reshape']
    %v2 = vld [vmem:[%s0] sm:$0x1]
    %vm3 = vcmask 64512
    %4 = vst.msk [vmem:[#allocation0] sm:$0x1] %vm3, %v2
    %s5 = scalar_lea.vmem %s0, 15
    %v6 = vld [vmem:[%s5] sm:$0x1]
    %7 = vrot.lane.b32.xlu0 %v6, 120
    %v8 = vpop.permute.xlu0 %7
    %vm9 = vcmask 1048512
    %10 = vst.msk [vmem:[#allocation0] sm:$0x1] %vm9, %v8
    %s11 = scalar_lea.vmem %s0, 14
    %v12 = vld [vmem:[%s11] sm:$0x1]
    %13 = vrot.lane.b32.xlu0 %v12, 112
    %v14 = vpop.permute.xlu0 %13
    %vm15 = vcmask 982912
    %16 = vst.msk [vmem:[#allocation0] sm:$0x1] %vm15, %v14
    %s17 = scalar_lea.vmem %s0, 13
    %v18 = vld [vmem:[%s17] sm:$0x1]
    %19 = vrot.lane.b32.xlu0 %v18, 104
    %v20 = vpop.permute.xlu0 %19
    %vm21 = vcmask 917312
    %22 = vst.msk [vmem:[#allocation0] sm:$0x1] %vm21, %v20
    %s23 = scalar_lea.vmem %s0, 12
    %v24 = vld [vmem:[%s23] sm:$0x1]
    %25 = vrot.lane.b32.xlu0 %v24, 96
    %v26 = vpop.permute.xlu0 %25
    %vm27 = vcmask 851712
    %28 = vst.msk [vmem:[#allocation0] sm:$0x1] %vm27, %v26
    %s29 = scalar_lea.vmem %s0, 11
    %v30 = vld [vmem:[%s29] sm:$0x1]
    %31 = vrot.lane.b32.xlu0 %v30, 88
    %v32 = vpop.permute.xlu0 %31
    %vm33 = vcmask 786112
    %34 = vst.msk [vmem:[#allocation0] sm:$0x1] %vm33, %v32
    %s35 = scalar_lea.vmem %s0, 10
    %v36 = vld [vmem:[%s35] sm:$0x1]
    %37 = vrot.lane.b32.xlu0 %v36, 80
    %v38 = vpop.permute.xlu0 %37
    %vm39 = vcmask 720512
    %40 = vst.msk [vmem:[#allocation0] sm:$0x1] %vm39, %v38
    %s41 = scalar_lea.vmem %s0, 9
    %v42 = vld [vmem:[%s41] sm:$0x1]
    %43 = vrot.lane.b32.xlu0 %v42, 72
    %v44 = vpop.permute.xlu0 %43
    %vm45 = vcmask 654912
    %46 = vst.msk [vmem:[#allocation0] sm:$0x1] %vm45, %v44
    %s47 = scalar_lea.vmem %s0, 8
    %v48 = vld [vmem:[%s47] sm:$0x1]
    %49 = vrot.lane.b32.xlu0 %v48, 64
    %v50 = vpop.permute.xlu0 %49
    %vm51 = vcmask 589312
    %52 = vst.msk [vmem:[#allocation0] sm:$0x1] %vm51, %v50
    %s53 = scalar_lea.vmem %s0, 7
    %v54 = vld [vmem:[%s53] sm:$0x1]
    %55 = vrot.lane.b32.xlu0 %v54, 56
    %v56 = vpop.permute.xlu0 %55
    %vm57 = vcmask 523712
    %58 = vst.msk [vmem:[#allocation0] sm:$0x1] %vm57, %v56
    %s59 = scalar_lea.vmem %s0, 6
    %v60 = vld [vmem:[%s59] sm:$0x1]
    %61 = vrot.lane.b32.xlu0 %v60, 48
    %v62 = vpop.permute.xlu0 %61
    %vm63 = vcmask 458112
    %64 = vst.msk [vmem:[#allocation0] sm:$0x1] %vm63, %v62
    %s65 = scalar_lea.vmem %s0, 5
    %v66 = vld [vmem:[%s65] sm:$0x1]
    %67 = vrot.lane.b32.xlu0 %v66, 40
    %v68 = vpop.permute.xlu0 %67
    %vm69 = vcmask 392512
    %70 = vst.msk [vmem:[#allocation0] sm:$0x1] %vm69, %v68
    %s71 = scalar_lea.vmem %s0, 4
    %v72 = vld [vmem:[%s71] sm:$0x1]
    %73 = vrot.lane.b32.xlu0 %v72, 32
    %v74 = vpop.permute.xlu0 %73
    %vm75 = vcmask 326912
    %76 = vst.msk [vmem:[#allocation0] sm:$0x1] %vm75, %v74
    %s77 = scalar_lea.vmem %s0, 3
    %v78 = vld [vmem:[%s77] sm:$0x1]
    %79 = vrot.lane.b32.xlu0 %v78, 24
    %v80 = vpop.permute.xlu0 %79
    %vm81 = vcmask 261312
    %82 = vst.msk [vmem:[#allocation0] sm:$0x1] %vm81, %v80
    %s83 = scalar_lea.vmem %s0, 2
    %v84 = vld [vmem:[%s83] sm:$0x1]
    %85 = vrot.lane.b32.xlu0 %v84, 16
    %v86 = vpop.permute.xlu0 %85
    %vm87 = vcmask 195712
    %88 = vst.msk [vmem:[#allocation0] sm:$0x1] %vm87, %v86
    %s89 = scalar_lea.vmem %s0, 1
    %v90 = vld [vmem:[%s89] sm:$0x1]
    %91 = vrot.lane.b32.xlu0 %v90, 8
    %v92 = vpop.permute.xlu0 %91
    %vm93 = vcmask 130112
    %94 = vst.msk [vmem:[#allocation0] sm:$0x1] %vm93, %v92
    %s96 = sshllo.u32 0, 1
    %v98 = vld [vmem:[#allocation0] sm:%s96]
    %s99 = sshllo.u32 0, 1
    %100 = vst [vmem:[%s1] sm:%s99] %v98

// kernel: basic_block_forward.1
$region0: #{basic_block_forward.1}
  #allocation0 [shape = 'u32[]', space=smem, size = 0x4, offset = 0x4, fixed_abs, tag = 'smem constant byte address 0x4 - core index']
  #allocation1 [shape = 'u32[144,128]{1,0:T(1,128)}', space=vmem, size = 0x12000, scoped, tag = 'internal scratch']
  %s0 = inlined_call_operand.vmem [shape: f32[256,128], index: 0, kind: input, shape index: {}]
  %s1 = inlined_call_operand.vmem [shape: bf16[128,384], index: 1, kind: input, shape index: {}]
  %s2 = inlined_call_operand.vmem [shape: f32[1,128], index: 2, kind: input, shape index: {}]
  %s3 = inlined_call_operand.vmem [shape: bf16[128,384], index: 3, kind: input, shape index: {}]
  %s4 = inlined_call_operand.vmem [shape: f32[1,128], index: 4, kind: input, shape index: {}]
  %s5 = inlined_call_operand.vmem [shape: f32[256,128], index: 5, kind: output, shape index: {}]
  %s6 = sld [smem:[#allocation0]]
  $region53: #{basic_block_forward.1} parent=0
    _
  %s8 = ssub.s32 1, %s6
  %s9 = scalar_select 0, %s8, %s6
  loop: start=0, step=1, limit=4
  $region2: #{basic_block_forward.1} parent=0 // loop_pre_header
    _
  $region3: #{basic_block_forward.1} parent=0 // loop_header
    %s11 = sphi 0, %s15
    %p12 = scmp.ge.s32.totalorder %s11, 4
    %s21 = sphi 0, %s23
    %s24 = sphi 0, %s21
    %s25 = sphi 0, %s24
    %s41 = sphi 0, %s25
    %s45 = sphi 0, %s45
    %s47 = sphi 0, %s45
    %s48 = sphi 0, %s47
    %s62 = sphi 0, %s48
    %s66 = sphi 0, %s66
    %s68 = sphi 0, %s66
    %s69 = sphi 0, %s68
    %s83 = sphi 0, %s69
    %s87 = sphi 0, %s87
    %s89 = sphi 0, %s87
    %s90 = sphi 0, %s89
    %s104 = sphi 0, %s90
    %s108 = sphi 0, %s108
    %s110 = sphi 0, %s108
    %s111 = sphi 0, %s110
    %s125 = sphi 0, %s111
    %s131 = sphi 0, %s133
    %s134 = sphi 0, %s131
    %s135 = sphi 0, %s134
    %s151 = sphi 0, %s135
  $region4: #{basic_block_forward.1} parent=0 // loop_header_branch
    %14 = sbr.rel (%p12) target = $region8
  $region5: #{basic_block_forward.1} parent=0 // loop_body
    %s16 = ssub.s32 %s11, 1
    %s17 = ssub.s32 %s11, 2
    %s18 = sadd.s32 %s11, 1
    %s19 = ssub.s32 %s11, %s18
    %p20 = scmp.eq.s32.totalorder %s19, 0
    %s22 = sadd.s32 %s21, 1
    %s23 = scalar_select %p20, %s21, %s22
    %p26 = pneg %p20
    %p27 = scmp.eq.s32.totalorder %s11, 1
    %p28 = por %p26, %p27
    %p29 = scmp.ne.s32.totalorder %s21, %s24
    %p30 = scmp.eq.s32.totalorder %s11, 0
    %p31 = por %p29, %p30
    %p32 = scmp.ne.s32.totalorder %s21, %s24
    %p33 = scmp.eq.s32.totalorder %s16, 1
    %p34 = por %p32, %p33
    %p35 = scmp.ne.s32.totalorder %s24, %s25
    %p36 = scmp.eq.s32.totalorder %s16, 0
    %p37 = por %p35, %p36
    %p38 = scmp.ne.s32.totalorder %s24, %s25
    %p39 = scmp.eq.s32.totalorder %s17, 1
    %p40 = por %p38, %p39
    %p42 = scmp.ne.s32.totalorder %s25, %s41
    %p43 = scmp.eq.s32.totalorder %s17, 0
    %p44 = por %p42, %p43
    %s46 = sadd.s32 %s45, 1
    %p49 = scmp.eq.s32.totalorder %s11, 1
    %p50 = scmp.ne.s32.totalorder %s45, %s47
    %p51 = scmp.eq.s32.totalorder %s11, 0
    %p52 = por %p50, %p51
    %p53 = scmp.ne.s32.totalorder %s45, %s47
    %p54 = scmp.eq.s32.totalorder %s16, 1
    %p55 = por %p53, %p54
    %p56 = scmp.ne.s32.totalorder %s47, %s48
    %p57 = scmp.eq.s32.totalorder %s16, 0
    %p58 = por %p56, %p57
    %p59 = scmp.ne.s32.totalorder %s47, %s48
    %p60 = scmp.eq.s32.totalorder %s17, 1
    %p61 = por %p59, %p60
    %p63 = scmp.ne.s32.totalorder %s48, %s62
    %p64 = scmp.eq.s32.totalorder %s17, 0
    %p65 = por %p63, %p64
    %s67 = sadd.s32 %s66, 1
    %p70 = scmp.eq.s32.totalorder %s11, 1
    %p71 = scmp.ne.s32.totalorder %s66, %s68
    %p72 = scmp.eq.s32.totalorder %s11, 0
    %p73 = por %p71, %p72
    %p74 = scmp.ne.s32.totalorder %s66, %s68
    %p75 = scmp.eq.s32.totalorder %s16, 1
    %p76 = por %p74, %p75
    %p77 = scmp.ne.s32.totalorder %s68, %s69
    %p78 = scmp.eq.s32.totalorder %s16, 0
    %p79 = por %p77, %p78
    %p80 = scmp.ne.s32.totalorder %s68, %s69
    %p81 = scmp.eq.s32.totalorder %s17, 1
    %p82 = por %p80, %p81
    %p84 = scmp.ne.s32.totalorder %s69, %s83
    %p85 = scmp.eq.s32.totalorder %s17, 0
    %p86 = por %p84, %p85
    %s88 = sadd.s32 %s87, 1
    %p91 = scmp.eq.s32.totalorder %s11, 1
    %p92 = scmp.ne.s32.totalorder %s87, %s89
    %p93 = scmp.eq.s32.totalorder %s11, 0
    %p94 = por %p92, %p93
    %p95 = scmp.ne.s32.totalorder %s87, %s89
    %p96 = scmp.eq.s32.totalorder %s16, 1
    %p97 = por %p95, %p96
    %p98 = scmp.ne.s32.totalorder %s89, %s90
    %p99 = scmp.eq.s32.totalorder %s16, 0
    %p100 = por %p98, %p99
    %p101 = scmp.ne.s32.totalorder %s89, %s90
    %p102 = scmp.eq.s32.totalorder %s17, 1
    %p103 = por %p101, %p102
    %p105 = scmp.ne.s32.totalorder %s90, %s104
    %p106 = scmp.eq.s32.totalorder %s17, 0
    %p107 = por %p105, %p106
    %s109 = sadd.s32 %s108, 1
    %p112 = scmp.eq.s32.totalorder %s11, 1
    %p113 = scmp.ne.s32.totalorder %s108, %s110
    %p114 = scmp.eq.s32.totalorder %s11, 0
    %p115 = por %p113, %p114
    %p116 = scmp.ne.s32.totalorder %s108, %s110
    %p117 = scmp.eq.s32.totalorder %s16, 1
    %p118 = por %p116, %p117
    %p119 = scmp.ne.s32.totalorder %s110, %s111
    %p120 = scmp.eq.s32.totalorder %s16, 0
    %p121 = por %p119, %p120
    %p122 = scmp.ne.s32.totalorder %s110, %s111
    %p123 = scmp.eq.s32.totalorder %s17, 1
    %p124 = por %p122, %p123
    %p126 = scmp.ne.s32.totalorder %s111, %s125
    %p127 = scmp.eq.s32.totalorder %s17, 0
    %p128 = por %p126, %p127
    %s129 = ssub.s32 %s11, %s18
    %p130 = scmp.eq.s32.totalorder %s129, 0
    %s132 = sadd.s32 %s131, 1
    %s133 = scalar_select %p130, %s131, %s132
    %p136 = pneg %p130
    %p137 = scmp.eq.s32.totalorder %s11, 1
    %p138 = por %p136, %p137
    %p139 = scmp.ne.s32.totalorder %s131, %s134
    %p140 = scmp.eq.s32.totalorder %s11, 0
    %p141 = por %p139, %p140
    %p142 = scmp.ne.s32.totalorder %s131, %s134
    %p143 = scmp.eq.s32.totalorder %s16, 1
    %p144 = por %p142, %p143
    %p145 = scmp.ne.s32.totalorder %s134, %s135
    %p146 = scmp.eq.s32.totalorder %s16, 0
    %p147 = por %p145, %p146
    %p148 = scmp.ne.s32.totalorder %s134, %s135
    %p149 = scmp.eq.s32.totalorder %s17, 1
    %p150 = por %p148, %p149
    %p152 = scmp.ne.s32.totalorder %s135, %s151
    %p153 = scmp.eq.s32.totalorder %s17, 0
    %p154 = por %p152, %p153
    %p155 = scmp.le.s32.totalorder 1, %s11
    %p156 = scmp.lt.s32.totalorder %s11, 3
    %p157 = pnand %p155, %p156
    %p158 = pneg %p157
    // Predicated region
    $region9: #{basic_block_forward.1} parent=5 // pred_check
      _
    $region10: #{basic_block_forward.1} parent=5 // pred_check_branch
      %160 = sbr.rel (%p157) target = $region12
    $region11: #{basic_block_forward.1} parent=5 // pred_region
      %s161 = ssub.s32 %s11, 1
      // Predicated region
      $region13: #{basic_block_forward.1} parent=11 // pred_check
        %p162 = pneg %p58
      $region14: #{basic_block_forward.1} parent=11 // pred_check_branch
        %164 = sbr.rel (%p162) target = $region16
      $region15: #{basic_block_forward.1} parent=11 // pred_region
        _
      $region16: #{basic_block_forward.1} parent=11 // pred_fallthru
        _
      // Predicated region
      $region17: #{basic_block_forward.1} parent=11 // pred_check
        %p165 = pneg %p79
      $region18: #{basic_block_forward.1} parent=11 // pred_check_branch
        %167 = sbr.rel (%p165) target = $region20
      $region19: #{basic_block_forward.1} parent=11 // pred_region
        _
      $region20: #{basic_block_forward.1} parent=11 // pred_fallthru
        _
      // Predicated region
      $region21: #{basic_block_forward.1} parent=11 // pred_check
        %p168 = pneg %p100
      $region22: #{basic_block_forward.1} parent=11 // pred_check_branch
        %170 = sbr.rel (%p168) target = $region24
      $region23: #{basic_block_forward.1} parent=11 // pred_region
        _
      $region24: #{basic_block_forward.1} parent=11 // pred_fallthru
        _
      // Predicated region
      $region25: #{basic_block_forward.1} parent=11 // pred_check
        %p171 = pneg %p121
      $region26: #{basic_block_forward.1} parent=11 // pred_check_branch
        %173 = sbr.rel (%p171) target = $region28
      $region27: #{basic_block_forward.1} parent=11 // pred_region
        _
      $region28: #{basic_block_forward.1} parent=11 // pred_fallthru
        _
    $region12: #{basic_block_forward.1} parent=5 // pred_fallthru
      _
    %p174 = scmp.lt.s32.totalorder %s11, 2
    // Predicated region
    $region29: #{basic_block_forward.1} parent=5 // pred_check
      %p175 = pneg %p174
    $region30: #{basic_block_forward.1} parent=5 // pred_check_branch
      %177 = sbr.rel (%p175) target = $region32
    $region31: #{basic_block_forward.1} parent=5 // pred_region
      // Predicated region
      $region33: #{basic_block_forward.1} parent=31 // pred_check
        %p178 = pneg %p31
      $region34: #{basic_block_forward.1} parent=31 // pred_check_branch
        %180 = sbr.rel (%p178) target = $region36
      $region35: #{basic_block_forward.1} parent=31 // pred_region
        %s181 = smul.u32 16, %s11
        %p182 = scmp.lt.s32.totalorder %s181, 31
        %s183 = scalar_select %p182, %s181, 31
        %s184 = smul.addr %s183, 8
        %s185 = scalar_lea.vmem %s0, %s184
        %s186 = smul.u32 16, %s11
      $region36: #{basic_block_forward.1} parent=31 // pred_fallthru
        _
    $region32: #{basic_block_forward.1} parent=5 // pred_fallthru
      _
    %p187 = scmp.le.s32.totalorder 1, %s11
    %p188 = scmp.lt.s32.totalorder %s11, 3
    %p189 = pnand %p187, %p188
    %p190 = pneg %p189
    // Predicated region
    $region37: #{basic_block_forward.1} parent=5 // pred_check
      _
    $region38: #{basic_block_forward.1} parent=5 // pred_check_branch
      %192 = sbr.rel (%p189) target = $region40
    $region39: #{basic_block_forward.1} parent=5 // pred_region
      %s193 = ssub.s32 %s11, 1
      %s194 = smul.u32 16, %s16
      %p195 = scmp.lt.s32.totalorder %s194, 31
      %s196 = scalar_select %p195, %s194, 31
      %s197 = smul.addr %s196, 8
      %s198 = scalar_lea.vmem %s0, %s197
      %p199 = pneg %p37
      %p200 = pneg %p34
      %p201 = pneg %p58
      %p202 = pneg %p55
      %p203 = pneg %p79
      %p204 = pneg %p76
      %p205 = pneg %p100
      %p206 = pneg %p97
      %p207 = pneg %p121
      %p208 = pneg %p118
      %p209 = pneg %p147
      %p210 = pneg %p144
      %s211 = smul.u32 16, %s16
      %p212 = scmp.lt.s32.totalorder %s211, 31
      %s213 = scalar_select %p212, %s211, 31
      %s214 = smul.addr %s213, 8
      %s215 = scalar_lea.vmem %s5, %s214
      %s216 = smul.u32 16, %s16
      %p217 = scmp.lt.s32.totalorder %s216, 31
      %s218 = scalar_select %p217, %s216, 31
      %s219 = smul.addr %s218, 8
      %s220 = scalar_lea.vmem %s0, %s219
      %s221 = smul.u32 16, %s16
      %s222 = smul.u32 16, %s16
      %p223 = scmp.lt.s32.totalorder %s222, 31
      %s224 = scalar_select %p223, %s222, 31
      %s225 = smul.addr %s224, 8
      %s226 = scalar_lea.vmem %s5, %s225
      %s227 = smul.u32 16, %s16
      %v229 = vlaneseq
      %v230 = vshrl.u32 %v229, 7
      %v231 = vadd.s32 %v230, 8
      %v232 = vadd.s32 %v230, 16
      %v233 = vadd.s32 %v230, 24
      %v234 = vadd.s32 %v230, 32
      %v235 = vadd.s32 %v230, 40
      %v236 = vadd.s32 %v230, 48
      %v237 = vadd.s32 %v230, 56
      %v238 = vlaneseq
      %v239 = vand.u32 %v238, 127
      %vm240 = vcmp.lt.s32.totalorder %v230, 0
      %v241 = vsub.s32 0, %v230
      %v242 = vsel %vm240, %v241, %v230
      %v243 = vshrl.u32 %v242, 4
      %v244 = vand.u32 %v242, 15
      %v245 = vsub.s32 0, %v244
      %v246 = vsel %vm240, %v245, %v244
      %vm247 = vcmp.lt.s32.totalorder %v231, 0
      %v248 = vsub.s32 0, %v231
      %v249 = vsel %vm247, %v248, %v231
      %v250 = vshrl.u32 %v249, 4
      %v251 = vand.u32 %v249, 15
      %v252 = vsub.s32 0, %v251
      %v253 = vsel %vm247, %v252, %v251
      %vm254 = vcmp.lt.s32.totalorder %v232, 0
      %v255 = vsub.s32 0, %v232
      %v256 = vsel %vm254, %v255, %v232
      %v257 = vshrl.u32 %v256, 4
      %v258 = vand.u32 %v256, 15
      %v259 = vsub.s32 0, %v258
      %v260 = vsel %vm254, %v259, %v258
      %vm261 = vcmp.lt.s32.totalorder %v233, 0
      %v262 = vsub.s32 0, %v233
      %v263 = vsel %vm261, %v262, %v233
      %v264 = vshrl.u32 %v263, 4
      %v265 = vand.u32 %v263, 15
      %v266 = vsub.s32 0, %v265
      %v267 = vsel %vm261, %v266, %v265
      %vm268 = vcmp.lt.s32.totalorder %v234, 0
      %v269 = vsub.s32 0, %v234
      %v270 = vsel %vm268, %v269, %v234
      %v271 = vshrl.u32 %v270, 4
      %v272 = vand.u32 %v270, 15
      %v273 = vsub.s32 0, %v272
      %v274 = vsel %vm268, %v273, %v272
      %vm275 = vcmp.lt.s32.totalorder %v235, 0
      %v276 = vsub.s32 0, %v235
      %v277 = vsel %vm275, %v276, %v235
      %v278 = vshrl.u32 %v277, 4
      %v279 = vand.u32 %v277, 15
      %v280 = vsub.s32 0, %v279
      %v281 = vsel %vm275, %v280, %v279
      %vm282 = vcmp.lt.s32.totalorder %v236, 0
      %v283 = vsub.s32 0, %v236
      %v284 = vsel %vm282, %v283, %v236
      %v285 = vshrl.u32 %v284, 4
      %v286 = vand.u32 %v284, 15
      %v287 = vsub.s32 0, %v286
      %v288 = vsel %vm282, %v287, %v286
      %vm289 = vcmp.lt.s32.totalorder %v237, 0
      %v290 = vsub.s32 0, %v237
      %v291 = vsel %vm289, %v290, %v237
      %v292 = vshrl.u32 %v291, 4
      %v293 = vand.u32 %v291, 15
      %v294 = vsub.s32 0, %v293
      %v295 = vsel %vm289, %v294, %v293
      %vm296 = vcmp.ne.s32.totalorder %v246, 0
      %vm297 = vcmp.ne.s32.totalorder %v253, 0
      %vm298 = vcmp.ne.s32.totalorder %v260, 0
      %vm299 = vcmp.ne.s32.totalorder %v267, 0
      %vm300 = vcmp.ne.s32.totalorder %v274, 0
      %vm301 = vcmp.ne.s32.totalorder %v281, 0
      %vm302 = vcmp.ne.s32.totalorder %v288, 0
      %vm303 = vcmp.ne.s32.totalorder %v295, 0
      %vm304 = vcmp.lt.s32.totalorder %v246, 0
      %vm305 = vcmp.lt.s32.totalorder %v253, 0
      %vm306 = vcmp.lt.s32.totalorder %v260, 0
      %vm307 = vcmp.lt.s32.totalorder %v267, 0
      %vm308 = vcmp.lt.s32.totalorder %v274, 0
      %vm309 = vcmp.lt.s32.totalorder %v281, 0
      %vm310 = vcmp.lt.s32.totalorder %v288, 0
      %vm311 = vcmp.lt.s32.totalorder %v295, 0
      %vm312 = vmand %vm304, %vm296
      %vm313 = vmand %vm305, %vm297
      %vm314 = vmand %vm306, %vm298
      %vm315 = vmand %vm307, %vm299
      %vm316 = vmand %vm308, %vm300
      %vm317 = vmand %vm309, %vm301
      %vm318 = vmand %vm310, %vm302
      %vm319 = vmand %vm311, %vm303
      %v320 = vadd.s32 %v246, 16
      %v321 = vadd.s32 %v253, 16
      %v322 = vadd.s32 %v260, 16
      %v323 = vadd.s32 %v267, 16
      %v324 = vadd.s32 %v274, 16
      %v325 = vadd.s32 %v281, 16
      %v326 = vadd.s32 %v288, 16
      %v327 = vadd.s32 %v295, 16
      %v328 = vsel %vm312, %v320, %v246
      %v329 = vsel %vm313, %v321, %v253
      %v330 = vsel %vm314, %v322, %v260
      %v331 = vsel %vm315, %v323, %v267
      %v332 = vsel %vm316, %v324, %v274
      %v333 = vsel %vm317, %v325, %v281
      %v334 = vsel %vm318, %v326, %v288
      %v335 = vsel %vm319, %v327, %v295
      %v336 = vadd.s32 %v239, 1
      %vm337 = vcmp.eq.s32.totalorder %v230, %v336
      %vm338 = vcmp.eq.s32.totalorder %v231, %v336
      %vm339 = vcmp.eq.s32.totalorder %v232, %v336
      %vm340 = vcmp.eq.s32.totalorder %v233, %v336
      %vm341 = vcmp.eq.s32.totalorder %v234, %v336
      %vm342 = vcmp.eq.s32.totalorder %v235, %v336
      %vm343 = vcmp.eq.s32.totalorder %v236, %v336
      %vm344 = vcmp.eq.s32.totalorder %v237, %v336
      %vm345 = vcmp.ne.s32.totalorder %v328, 0
      %vm346 = vcmp.ne.s32.totalorder %v329, 0
      %vm347 = vcmp.ne.s32.totalorder %v330, 0
      %vm348 = vcmp.ne.s32.totalorder %v331, 0
      %vm349 = vcmp.ne.s32.totalorder %v332, 0
      %vm350 = vcmp.ne.s32.totalorder %v333, 0
      %vm351 = vcmp.ne.s32.totalorder %v334, 0
      %vm352 = vcmp.ne.s32.totalorder %v335, 0
      %vm353 = vmand %vm337, %vm345
      %vm354 = vmand %vm338, %vm346
      %vm355 = vmand %vm339, %vm347
      %vm356 = vmand %vm340, %vm348
      %vm357 = vmand %vm341, %vm349
      %vm358 = vmand %vm342, %vm350
      %vm359 = vmand %vm343, %vm351
      %vm360 = vmand %vm344, %vm352
      %v361 = vsel %vm353, 1.0, 0.0
      %v362 = vsel %vm354, 1.0, 0.0
      %v363 = vsel %vm355, 1.0, 0.0
      %v364 = vsel %vm356, 1.0, 0.0
      %v365 = vsel %vm357, 1.0, 0.0
      %v366 = vsel %vm358, 1.0, 0.0
      %v367 = vsel %vm359, 1.0, 0.0
      %v368 = vsel %vm360, 1.0, 0.0
      %v369 = vsub.s32 %v239, 1
      %vm370 = vcmp.eq.s32.totalorder %v230, %v369
      %vm371 = vcmp.eq.s32.totalorder %v231, %v369
      %vm372 = vcmp.eq.s32.totalorder %v232, %v369
      %vm373 = vcmp.eq.s32.totalorder %v233, %v369
      %vm374 = vcmp.eq.s32.totalorder %v234, %v369
      %vm375 = vcmp.eq.s32.totalorder %v235, %v369
      %vm376 = vcmp.eq.s32.totalorder %v236, %v369
      %vm377 = vcmp.eq.s32.totalorder %v237, %v369
      %vm378 = vcmp.ne.s32.totalorder %v328, 15
      %vm379 = vcmp.ne.s32.totalorder %v329, 15
      %vm380 = vcmp.ne.s32.totalorder %v330, 15
      %vm381 = vcmp.ne.s32.totalorder %v331, 15
      %vm382 = vcmp.ne.s32.totalorder %v332, 15
      %vm383 = vcmp.ne.s32.totalorder %v333, 15
      %vm384 = vcmp.ne.s32.totalorder %v334, 15
      %vm385 = vcmp.ne.s32.totalorder %v335, 15
      %vm386 = vmand %vm370, %vm378
      %vm387 = vmand %vm371, %vm379
      %vm388 = vmand %vm372, %vm380
      %vm389 = vmand %vm373, %vm381
      %vm390 = vmand %vm374, %vm382
      %vm391 = vmand %vm375, %vm383
      %vm392 = vmand %vm376, %vm384
      %vm393 = vmand %vm377, %vm385
      %v394 = vsel %vm386, 1.0, 0.0
      %v395 = vsel %vm387, 1.0, 0.0
      %v396 = vsel %vm388, 1.0, 0.0
      %v397 = vsel %vm389, 1.0, 0.0
      %v398 = vsel %vm390, 1.0, 0.0
      %v399 = vsel %vm391, 1.0, 0.0
      %v400 = vsel %vm392, 1.0, 0.0
      %v401 = vsel %vm393, 1.0, 0.0
      %v402 = vld [vmem:[%s220] sm:$0xff]
      %v403 = vld [vmem:[%s220 + $0x8] sm:$0xff]
      %v404 = vld [vmem:[%s220 + $0x10] sm:$0xff]
      %v405 = vld [vmem:[%s220 + $0x18] sm:$0xff]
      %v406 = vld [vmem:[%s220 + $0x20] sm:$0xff]
      %v407 = vld [vmem:[%s220 + $0x28] sm:$0xff]
      %v408 = vld [vmem:[%s220 + $0x30] sm:$0xff]
      %v409 = vld [vmem:[%s220 + $0x38] sm:$0xff]
      %v410 = vpack.c.bf16 %v403, %v402
      %v411 = vpack.c.bf16 %v405, %v404
      %v412 = vpack.c.bf16 %v407, %v406
      %v413 = vpack.c.bf16 %v409, %v408
      %v414 = vld [vmem:[%s1] sm:$0xff]
      %v415 = vld [vmem:[%s1 + $0x8] sm:$0xf]
      %v416 = vld [vmem:[%s1 + $0xc] sm:$0xff]
      %v417 = vld [vmem:[%s1 + $0x14] sm:$0xf]
      %v418 = vld [vmem:[%s1 + $0x18] sm:$0xff]
      %v419 = vld [vmem:[%s1 + $0x20] sm:$0xf]
      %v420 = vld [vmem:[%s1 + $0x24] sm:$0xff]
      %v421 = vld [vmem:[%s1 + $0x2c] sm:$0xf]
      %v422 = vld [vmem:[%s1 + $0x30] sm:$0xff]
      %v423 = vld [vmem:[%s1 + $0x38] sm:$0xf]
      %v424 = vld [vmem:[%s1 + $0x3c] sm:$0xff]
      %v425 = vld [vmem:[%s1 + $0x44] sm:$0xf]
      %v426 = vld [vmem:[%s1 + $0x48] sm:$0xff]
      %v427 = vld [vmem:[%s1 + $0x50] sm:$0xf]
      %v428 = vld [vmem:[%s1 + $0x54] sm:$0xff]
      %v429 = vld [vmem:[%s1 + $0x5c] sm:$0xf]
      %v430 = vld [vmem:[%s1 + $0x60] sm:$0xff]
      %v431 = vld [vmem:[%s1 + $0x68] sm:$0xf]
      %v432 = vld [vmem:[%s1 + $0x6c] sm:$0xff]
      %v433 = vld [vmem:[%s1 + $0x74] sm:$0xf]
      %v434 = vld [vmem:[%s1 + $0x78] sm:$0xff]
      %v435 = vld [vmem:[%s1 + $0x80] sm:$0xf]
      %v436 = vld [vmem:[%s1 + $0x84] sm:$0xff]
      %v437 = vld [vmem:[%s1 + $0x8c] sm:$0xf]
      %v438 = vld [vmem:[%s1 + $0x90] sm:$0xff]
      %v439 = vld [vmem:[%s1 + $0x98] sm:$0xf]
      %v440 = vld [vmem:[%s1 + $0x9c] sm:$0xff]
      %v441 = vld [vmem:[%s1 + $0xa4] sm:$0xf]
      %v442 = vld [vmem:[%s1 + $0xa8] sm:$0xff]
      %v443 = vld [vmem:[%s1 + $0xb0] sm:$0xf]
      %v444 = vld [vmem:[%s1 + $0xb4] sm:$0xff]
      %v445 = vld [vmem:[%s1 + $0xbc] sm:$0xf]
      %v478 = vunpack.c.l.b16 %v414
      %v479 = vunpack.c.h.b16 %v414
      %v480 = vunpack.c.l.b16 %v415
      %v481 = vunpack.c.l.b16 %v416
      %v482 = vunpack.c.h.b16 %v416
      %v483 = vunpack.c.l.b16 %v417
      %v484 = vunpack.c.l.b16 %v418
      %v485 = vunpack.c.h.b16 %v418
      %v486 = vunpack.c.l.b16 %v419
      %v487 = vunpack.c.l.b16 %v420
      %v488 = vunpack.c.h.b16 %v420
      %v489 = vunpack.c.l.b16 %v421
      %v490 = vunpack.c.l.b16 %v422
      %v491 = vunpack.c.h.b16 %v422
      %v492 = vunpack.c.l.b16 %v423
      %v493 = vunpack.c.l.b16 %v424
      %v494 = vunpack.c.h.b16 %v424
      %v495 = vunpack.c.l.b16 %v425
      %v496 = vunpack.c.l.b16 %v426
      %v497 = vunpack.c.h.b16 %v426
      %v498 = vunpack.c.l.b16 %v427
      %v499 = vunpack.c.l.b16 %v428
      %v500 = vunpack.c.h.b16 %v428
      %v501 = vunpack.c.l.b16 %v429
      %v502 = vunpack.c.l.b16 %v430
      %v503 = vunpack.c.h.b16 %v430
      %v504 = vunpack.c.l.b16 %v431
      %v505 = vunpack.c.l.b16 %v432
      %v506 = vunpack.c.h.b16 %v432
      %v507 = vunpack.c.l.b16 %v433
      %v508 = vunpack.c.l.b16 %v434
      %v509 = vunpack.c.h.b16 %v434
      %v510 = vunpack.c.l.b16 %v435
      %v511 = vunpack.c.l.b16 %v436
      %v512 = vunpack.c.h.b16 %v436
      %v513 = vunpack.c.l.b16 %v437
      %v514 = vunpack.c.l.b16 %v438
      %v515 = vunpack.c.h.b16 %v438
      %v516 = vunpack.c.l.b16 %v439
      %v517 = vunpack.c.l.b16 %v440
      %v518 = vunpack.c.h.b16 %v440
      %v519 = vunpack.c.l.b16 %v441
      %v520 = vunpack.c.l.b16 %v442
      %v521 = vunpack.c.h.b16 %v442
      %v522 = vunpack.c.l.b16 %v443
      %v523 = vunpack.c.l.b16 %v444
      %v524 = vunpack.c.h.b16 %v444
      %v525 = vunpack.c.l.b16 %v445
      %v526 = vpack.c.b16 %v481, %v478
      %v527 = vpack.c.b16 %v482, %v479
      %v528 = vpack.c.b16 %v483, %v480
      %v529 = vpack.c.b16 %v487, %v484
      %v530 = vpack.c.b16 %v488, %v485
      %v531 = vpack.c.b16 %v489, %v486
      %v532 = vpack.c.b16 %v493, %v490
      %v533 = vpack.c.b16 %v494, %v491
      %v534 = vpack.c.b16 %v495, %v492
      %v535 = vpack.c.b16 %v499, %v496
      %v536 = vpack.c.b16 %v500, %v497
      %v537 = vpack.c.b16 %v501, %v498
      %v538 = vpack.c.b16 %v505, %v502
      %v539 = vpack.c.b16 %v506, %v503
      %v540 = vpack.c.b16 %v507, %v504
      %v541 = vpack.c.b16 %v511, %v508
      %v542 = vpack.c.b16 %v512, %v509
      %v543 = vpack.c.b16 %v513, %v510
      %v544 = vpack.c.b16 %v517, %v514
      %v545 = vpack.c.b16 %v518, %v515
      %v546 = vpack.c.b16 %v519, %v516
      %v547 = vpack.c.b16 %v523, %v520
      %v548 = vpack.c.b16 %v524, %v521
      %v549 = vpack.c.b16 %v525, %v522
      %574 = vmatprep.subr.bf16.mxu0 %v527
      %575 = vmatpush1.bf16.msra.mxu0 %v526
      %576 = vmatprep.subr.bf16.mxu0 %v530
      %577 = vmatpush1.bf16.msra.mxu0 %v529
      %578 = vmatprep.subr.bf16.mxu0 %v533
      %579 = vmatpush1.bf16.msra.mxu0 %v532
      %580 = vmatprep.subr.bf16.mxu0 %v536
      %581 = vmatpush1.bf16.msra.mxu0 %v535
      %582 = vmatprep.subr.bf16.mxu0 %v539
      %583 = vmatpush1.bf16.msra.mxu0 %v538
      %584 = vmatprep.subr.bf16.mxu0 %v542
      %585 = vmatpush1.bf16.msra.mxu0 %v541
      %586 = vmatprep.subr.bf16.mxu0 %v545
      %587 = vmatpush1.bf16.msra.mxu0 %v544
      %588 = vmatprep.subr.bf16.mxu0 %v548
      %589 = vmatpush1.bf16.msra.mxu0 %v547
      %590 = vmatprep.subr.bf16.mxu0 0
      %591 = vmatpush1.bf16.msra.mxu0 0
      %592 = vmatprep.subr.bf16.mxu0 0
      %593 = vmatpush1.bf16.msra.mxu0 0
      %594 = vmatprep.subr.bf16.mxu0 0
      %595 = vmatpush1.bf16.msra.mxu0 0
      %596 = vmatprep.subr.bf16.mxu0 0
      %597 = vmatpush1.bf16.msra.mxu0 0
      %598 = vmatprep.subr.bf16.mxu0 0
      %599 = vmatpush1.bf16.msra.mxu0 0
      %600 = vmatprep.subr.bf16.mxu0 0
      %601 = vmatpush1.bf16.msra.mxu0 0
      %602 = vmatprep.subr.bf16.mxu0 0
      %603 = vmatpush1.bf16.msra.mxu0 0
      %604 = vmatprep.subr.bf16.mxu0 0
      %605 = vmatpush1.bf16.msra.mxu0 0
      %606 = vmatprep.mubr.bf16.mxu0 0
      %607 = vmatmul.mubr.bf16.gmra.mrb[0].mxu0 %v410
      %v608 = vpop.f32.mrb[0].mxu0
      %v609 = vadd.f32 0.0, %v608
      %v610 = vpop.f32.mrb[0].mxu0
      %v611 = vadd.f32 0.0, %v610
      %v612 = vpop.f32.mrb[0].mxu0
      %v613 = vadd.f32 0.0, %v612
      %v614 = vpop.f32.mrb[0].mxu0
      %v615 = vadd.f32 0.0, %v614
      %616 = vmatprep.mubr.bf16.mxu0 0
      %617 = vmatmul.mubr.bf16.gmra.mrb[0].mxu0 %v411
      %v618 = vpop.f32.mrb[0].mxu0
      %v619 = vadd.f32 0.0, %v618
      %v620 = vpop.f32.mrb[0].mxu0
      %v621 = vadd.f32 0.0, %v620
      %v622 = vpop.f32.mrb[0].mxu0
      %v623 = vadd.f32 0.0, %v622
      %v624 = vpop.f32.mrb[0].mxu0
      %v625 = vadd.f32 0.0, %v624
      %626 = vmatprep.mubr.bf16.mxu0 0
      %627 = vmatmul.mubr.bf16.gmra.mrb[0].mxu0 %v412
      %v628 = vpop.f32.mrb[0].mxu0
      %v629 = vadd.f32 0.0, %v628
      %v630 = vpop.f32.mrb[0].mxu0
      %v631 = vadd.f32 0.0, %v630
      %v632 = vpop.f32.mrb[0].mxu0
      %v633 = vadd.f32 0.0, %v632
      %v634 = vpop.f32.mrb[0].mxu0
      %v635 = vadd.f32 0.0, %v634
      %636 = vmatprep.mubr.bf16.mxu0 0
      %637 = vmatmul.mubr.bf16.gmra.mrb[0].mxu0 %v413
      %v638 = vpop.f32.mrb[0].mxu0
      %v639 = vadd.f32 0.0, %v638
      %v640 = vpop.f32.mrb[0].mxu0
      %v641 = vadd.f32 0.0, %v640
      %v642 = vpop.f32.mrb[0].mxu0
      %v643 = vadd.f32 0.0, %v642
      %v644 = vpop.f32.mrb[0].mxu0
      %v645 = vadd.f32 0.0, %v644
      %646 = vdwg.mxu0
      %647 = vmatprep.subr.bf16.mxu0 0
      %648 = vmatpush1.bf16.msra.mxu0 %v528
      %649 = vmatprep.subr.bf16.mxu0 0
      %650 = vmatpush1.bf16.msra.mxu0 %v531
      %651 = vmatprep.subr.bf16.mxu0 0
      %652 = vmatpush1.bf16.msra.mxu0 %v534
      %653 = vmatprep.subr.bf16.mxu0 0
      %654 = vmatpush1.bf16.msra.mxu0 %v537
      %655 = vmatprep.subr.bf16.mxu0 0
      %656 = vmatpush1.bf16.msra.mxu0 %v540
      %657 = vmatprep.subr.bf16.mxu0 0
      %658 = vmatpush1.bf16.msra.mxu0 %v543
      %659 = vmatprep.subr.bf16.mxu0 0
      %660 = vmatpush1.bf16.msra.mxu0 %v546
      %661 = vmatprep.subr.bf16.mxu0 0
      %662 = vmatpush1.bf16.msra.mxu0 %v549
      %663 = vmatprep.subr.bf16.mxu0 0
      %664 = vmatpush1.bf16.msra.mxu0 0
      %665 = vmatprep.subr.bf16.mxu0 0
      %666 = vmatpush1.bf16.msra.mxu0 0
      %667 = vmatprep.subr.bf16.mxu0 0
      %668 = vmatpush1.bf16.msra.mxu0 0
      %669 = vmatprep.subr.bf16.mxu0 0
      %670 = vmatpush1.bf16.msra.mxu0 0
      %671 = vmatprep.subr.bf16.mxu0 0
      %672 = vmatpush1.bf16.msra.mxu0 0
      %673 = vmatprep.subr.bf16.mxu0 0
      %674 = vmatpush1.bf16.msra.mxu0 0
      %675 = vmatprep.subr.bf16.mxu0 0
      %676 = vmatpush1.bf16.msra.mxu0 0
      %677 = vmatprep.subr.bf16.mxu0 0
      %678 = vmatpush1.bf16.msra.mxu0 0
      %679 = vmatprep.mubr.bf16.mxu0 0
      %680 = vmatmul.mubr.bf16.gmra.mrb[0].mxu0 %v410
      %v681 = vpop.f32.mrb[0].mxu0
      %v682 = vadd.f32 0.0, %v681
      %v683 = vpop.f32.mrb[0].mxu0
      %v684 = vpop.f32.mrb[0].mxu0
      %v685 = vadd.f32 0.0, %v684
      %v686 = vpop.f32.mrb[0].mxu0
      %687 = vmatprep.mubr.bf16.mxu0 0
      %688 = vmatmul.mubr.bf16.gmra.mrb[0].mxu0 %v411
      %v689 = vpop.f32.mrb[0].mxu0
      %v690 = vadd.f32 0.0, %v689
      %v691 = vpop.f32.mrb[0].mxu0
      %v692 = vpop.f32.mrb[0].mxu0
      %v693 = vadd.f32 0.0, %v692
      %v694 = vpop.f32.mrb[0].mxu0
      %695 = vmatprep.mubr.bf16.mxu0 0
      %696 = vmatmul.mubr.bf16.gmra.mrb[0].mxu0 %v412
      %v697 = vpop.f32.mrb[0].mxu0
      %v698 = vadd.f32 0.0, %v697
      %v699 = vpop.f32.mrb[0].mxu0
      %v700 = vpop.f32.mrb[0].mxu0
      %v701 = vadd.f32 0.0, %v700
      %v702 = vpop.f32.mrb[0].mxu0
      %703 = vmatprep.mubr.bf16.mxu0 0
      %704 = vmatmul.mubr.bf16.gmra.mrb[0].mxu0 %v413
      %v705 = vpop.f32.mrb[0].mxu0
      %v706 = vadd.f32 0.0, %v705
      %v707 = vpop.f32.mrb[0].mxu0
      %v708 = vpop.f32.mrb[0].mxu0
      %v709 = vadd.f32 0.0, %v708
      %v710 = vpop.f32.mrb[0].mxu0
      %711 = vdwg.mxu0
      %v712 = vld [vmem:[%s2] sm:$0x1]
      %v714 = vlaneseq
      %v715 = vshrl.u32 %v714, 7
      %v716 = vsub.s32 0, %v715
      %v717 = vrot.slane %v712, %v716
      %v719 = vadd.f32 %v611, %v717
      %v720 = vadd.f32 %v615, %v717
      %v721 = vadd.f32 %v621, %v717
      %v722 = vadd.f32 %v625, %v717
      %v723 = vadd.f32 %v631, %v717
      %v724 = vadd.f32 %v635, %v717
      %v725 = vadd.f32 %v641, %v717
      %v726 = vadd.f32 %v645, %v717
      %vm727 = vcmask 523264
      %v729 = vsel %vm727, %v361, 0
      %v732 = vsel %vm727, %v362, 0
      %v735 = vsel %vm727, %v363, 0
      %v738 = vsel %vm727, %v364, 0
      %v741 = vsel %vm727, %v365, 0
      %v744 = vsel %vm727, %v366, 0
      %v747 = vsel %vm727, %v367, 0
      %v750 = vsel %vm727, %v368, 0
      %752 = vmatprep.subr.mxu0 0.0
      %753 = vmatpush1.msra.mxu0 %v609
      %754 = vmatprep.subr.mxu0 0.0
      %755 = vmatpush1.msra.mxu0 %v613
      %756 = vmatprep.subr.mxu0 0.0
      %757 = vmatpush1.msra.mxu0 %v619
      %758 = vmatprep.subr.mxu0 0.0
      %759 = vmatpush1.msra.mxu0 %v623
      %760 = vmatprep.subr.mxu0 0.0
      %761 = vmatpush1.msra.mxu0 %v629
      %762 = vmatprep.subr.mxu0 0.0
      %763 = vmatpush1.msra.mxu0 %v633
      %764 = vmatprep.subr.mxu0 0.0
      %765 = vmatpush1.msra.mxu0 %v639
      %766 = vmatprep.subr.mxu0 0.0
      %767 = vmatpush1.msra.mxu0 %v643
      %768 = vmatprep.subr.mxu0 0.0
      %769 = vmatpush1.msra.mxu0 0.0
      %770 = vmatprep.subr.mxu0 0.0
      %771 = vmatpush1.msra.mxu0 0.0
      %772 = vmatprep.subr.mxu0 0.0
      %773 = vmatpush1.msra.mxu0 0.0
      %774 = vmatprep.subr.mxu0 0.0
      %775 = vmatpush1.msra.mxu0 0.0
      %776 = vmatprep.subr.mxu0 0.0
      %777 = vmatpush1.msra.mxu0 0.0
      %778 = vmatprep.subr.mxu0 0.0
      %779 = vmatpush1.msra.mxu0 0.0
      %780 = vmatprep.subr.mxu0 0.0
      %781 = vmatpush1.msra.mxu0 0.0
      %782 = vmatprep.subr.mxu0 0.0
      %783 = vmatpush1.msra.mxu0 0.0
      %784 = vmatprep.subr.mxu0 0.0
      %785 = vmatpush1.msra.mxu0 0.0
      %786 = vmatprep.subr.mxu0 0.0
      %787 = vmatpush1.msra.mxu0 0.0
      %788 = vmatprep.subr.mxu0 0.0
      %789 = vmatpush1.msra.mxu0 0.0
      %790 = vmatprep.subr.mxu0 0.0
      %791 = vmatpush1.msra.mxu0 0.0
      %792 = vmatprep.subr.mxu0 0.0
      %793 = vmatpush1.msra.mxu0 0.0
      %794 = vmatprep.subr.mxu0 0.0
      %795 = vmatpush1.msra.mxu0 0.0
      %796 = vmatprep.subr.mxu0 0.0
      %797 = vmatpush1.msra.mxu0 0.0
      %798 = vmatprep.subr.mxu0 0.0
      %799 = vmatpush1.msra.mxu0 0.0
      %800 = vmatprep.subr.mxu0 0.0
      %801 = vmatpush1.msra.mxu0 0.0
      %802 = vmatprep.subr.mxu0 0.0
      %803 = vmatpush1.msra.mxu0 0.0
      %804 = vmatprep.subr.mxu0 0.0
      %805 = vmatpush1.msra.mxu0 0.0
      %806 = vmatprep.subr.mxu0 0.0
      %807 = vmatpush1.msra.mxu0 0.0
      %808 = vmatprep.subr.mxu0 0.0
      %809 = vmatpush1.msra.mxu0 0.0
      %810 = vmatprep.subr.mxu0 0.0
      %811 = vmatpush1.msra.mxu0 0.0
      %812 = vmatprep.subr.mxu0 0.0
      %813 = vmatpush1.msra.mxu0 0.0
      %814 = vmatprep.subr.mxu0 0.0
      %815 = vmatpush1.msra.mxu0 0.0
      %816 = vmatprep.mubr.f32.mxu0 0.0
      %817 = vmatmul.mubr.f32.gmra.mrb[0].mxu0 %v729
      %v818 = vpop.f32.mrb[0].mxu0
      %v819 = vadd.f32 0.0, %v818
      %v820 = vpop.f32.mrb[0].mxu0
      %821 = vmatprep.mubr.f32.mxu0 0.0
      %822 = vmatmul.mubr.f32.gmra.mrb[0].mxu0 %v732
      %v823 = vpop.f32.mrb[0].mxu0
      %v824 = vadd.f32 0.0, %v823
      %v825 = vpop.f32.mrb[0].mxu0
      %826 = vmatprep.mubr.f32.mxu0 0.0
      %827 = vmatmul.mubr.f32.gmra.mrb[0].mxu0 %v735
      %v828 = vpop.f32.mrb[0].mxu0
      %v829 = vadd.f32 0.0, %v828
      %v830 = vpop.f32.mrb[0].mxu0
      %831 = vmatprep.mubr.f32.mxu0 0.0
      %832 = vmatmul.mubr.f32.gmra.mrb[0].mxu0 %v738
      %v833 = vpop.f32.mrb[0].mxu0
      %v834 = vadd.f32 0.0, %v833
      %v835 = vpop.f32.mrb[0].mxu0
      %836 = vmatprep.mubr.f32.mxu0 0.0
      %837 = vmatmul.mubr.f32.gmra.mrb[0].mxu0 %v741
      %v838 = vpop.f32.mrb[0].mxu0
      %v839 = vadd.f32 0.0, %v838
      %v840 = vpop.f32.mrb[0].mxu0
      %841 = vmatprep.mubr.f32.mxu0 0.0
      %842 = vmatmul.mubr.f32.gmra.mrb[0].mxu0 %v744
      %v843 = vpop.f32.mrb[0].mxu0
      %v844 = vadd.f32 0.0, %v843
      %v845 = vpop.f32.mrb[0].mxu0
      %846 = vmatprep.mubr.f32.mxu0 0.0
      %847 = vmatmul.mubr.f32.gmra.mrb[0].mxu0 %v747
      %v848 = vpop.f32.mrb[0].mxu0
      %v849 = vadd.f32 0.0, %v848
      %v850 = vpop.f32.mrb[0].mxu0
      %851 = vmatprep.mubr.f32.mxu0 0.0
      %852 = vmatmul.mubr.f32.gmra.mrb[0].mxu0 %v750
      %v853 = vpop.f32.mrb[0].mxu0
      %v854 = vadd.f32 0.0, %v853
      %v855 = vpop.f32.mrb[0].mxu0
      %856 = vdwg.mxu0
      %v857 = vadd.f32 %v719, %v819
      %v858 = vadd.f32 %v720, %v824
      %v859 = vadd.f32 %v721, %v829
      %v860 = vadd.f32 %v722, %v834
      %v861 = vadd.f32 %v723, %v839
      %v862 = vadd.f32 %v724, %v844
      %v863 = vadd.f32 %v725, %v849
      %v864 = vadd.f32 %v726, %v854
      %v866 = vsel %vm727, %v394, 0
      %v869 = vsel %vm727, %v395, 0
      %v872 = vsel %vm727, %v396, 0
      %v875 = vsel %vm727, %v397, 0
      %v878 = vsel %vm727, %v398, 0
      %v881 = vsel %vm727, %v399, 0
      %v884 = vsel %vm727, %v400, 0
      %v887 = vsel %vm727, %v401, 0
      %889 = vmatprep.subr.mxu0 0.0
      %890 = vmatpush1.msra.mxu0 %v682
      %891 = vmatprep.subr.mxu0 0.0
      %892 = vmatpush1.msra.mxu0 %v685
      %893 = vmatprep.subr.mxu0 0.0
      %894 = vmatpush1.msra.mxu0 %v690
      %895 = vmatprep.subr.mxu0 0.0
      %896 = vmatpush1.msra.mxu0 %v693
      %897 = vmatprep.subr.mxu0 0.0
      %898 = vmatpush1.msra.mxu0 %v698
      %899 = vmatprep.subr.mxu0 0.0
      %900 = vmatpush1.msra.mxu0 %v701
      %901 = vmatprep.subr.mxu0 0.0
      %902 = vmatpush1.msra.mxu0 %v706
      %903 = vmatprep.subr.mxu0 0.0
      %904 = vmatpush1.msra.mxu0 %v709
      %905 = vmatprep.subr.mxu0 0.0
      %906 = vmatpush1.msra.mxu0 0.0
      %907 = vmatprep.subr.mxu0 0.0
      %908 = vmatpush1.msra.mxu0 0.0
      %909 = vmatprep.subr.mxu0 0.0
      %910 = vmatpush1.msra.mxu0 0.0
      %911 = vmatprep.subr.mxu0 0.0
      %912 = vmatpush1.msra.mxu0 0.0
      %913 = vmatprep.subr.mxu0 0.0
      %914 = vmatpush1.msra.mxu0 0.0
      %915 = vmatprep.subr.mxu0 0.0
      %916 = vmatpush1.msra.mxu0 0.0
      %917 = vmatprep.subr.mxu0 0.0
      %918 = vmatpush1.msra.mxu0 0.0
      %919 = vmatprep.subr.mxu0 0.0
      %920 = vmatpush1.msra.mxu0 0.0
      %921 = vmatprep.subr.mxu0 0.0
      %922 = vmatpush1.msra.mxu0 0.0
      %923 = vmatprep.subr.mxu0 0.0
      %924 = vmatpush1.msra.mxu0 0.0
      %925 = vmatprep.subr.mxu0 0.0
      %926 = vmatpush1.msra.mxu0 0.0
      %927 = vmatprep.subr.mxu0 0.0
      %928 = vmatpush1.msra.mxu0 0.0
      %929 = vmatprep.subr.mxu0 0.0
      %930 = vmatpush1.msra.mxu0 0.0
      %931 = vmatprep.subr.mxu0 0.0
      %932 = vmatpush1.msra.mxu0 0.0
      %933 = vmatprep.subr.mxu0 0.0
      %934 = vmatpush1.msra.mxu0 0.0
      %935 = vmatprep.subr.mxu0 0.0
      %936 = vmatpush1.msra.mxu0 0.0
      %937 = vmatprep.subr.mxu0 0.0
      %938 = vmatpush1.msra.mxu0 0.0
      %939 = vmatprep.subr.mxu0 0.0
      %940 = vmatpush1.msra.mxu0 0.0
      %941 = vmatprep.subr.mxu0 0.0
      %942 = vmatpush1.msra.mxu0 0.0
      %943 = vmatprep.subr.mxu0 0.0
      %944 = vmatpush1.msra.mxu0 0.0
      %945 = vmatprep.subr.mxu0 0.0
      %946 = vmatpush1.msra.mxu0 0.0
      %947 = vmatprep.subr.mxu0 0.0
      %948 = vmatpush1.msra.mxu0 0.0
      %949 = vmatprep.subr.mxu0 0.0
      %950 = vmatpush1.msra.mxu0 0.0
      %951 = vmatprep.subr.mxu0 0.0
      %952 = vmatpush1.msra.mxu0 0.0
      %953 = vmatprep.mubr.f32.mxu0 0.0
      %954 = vmatmul.mubr.f32.gmra.mrb[0].mxu0 %v866
      %v955 = vpop.f32.mrb[0].mxu0
      %v956 = vadd.f32 0.0, %v955
      %v957 = vpop.f32.mrb[0].mxu0
      %958 = vmatprep.mubr.f32.mxu0 0.0
      %959 = vmatmul.mubr.f32.gmra.mrb[0].mxu0 %v869
      %v960 = vpop.f32.mrb[0].mxu0
      %v961 = vadd.f32 0.0, %v960
      %v962 = vpop.f32.mrb[0].mxu0
      %963 = vmatprep.mubr.f32.mxu0 0.0
      %964 = vmatmul.mubr.f32.gmra.mrb[0].mxu0 %v872
      %v965 = vpop.f32.mrb[0].mxu0
      %v966 = vadd.f32 0.0, %v965
      %v967 = vpop.f32.mrb[0].mxu0
      %968 = vmatprep.mubr.f32.mxu0 0.0
      %969 = vmatmul.mubr.f32.gmra.mrb[0].mxu0 %v875
      %v970 = vpop.f32.mrb[0].mxu0
      %v971 = vadd.f32 0.0, %v970
      %v972 = vpop.f32.mrb[0].mxu0
      %973 = vmatprep.mubr.f32.mxu0 0.0
      %974 = vmatmul.mubr.f32.gmra.mrb[0].mxu0 %v878
      %v975 = vpop.f32.mrb[0].mxu0
      %v976 = vadd.f32 0.0, %v975
      %v977 = vpop.f32.mrb[0].mxu0
      %978 = vmatprep.mubr.f32.mxu0 0.0
      %979 = vmatmul.mubr.f32.gmra.mrb[0].mxu0 %v881
      %v980 = vpop.f32.mrb[0].mxu0
      %v981 = vadd.f32 0.0, %v980
      %v982 = vpop.f32.mrb[0].mxu0
      %983 = vmatprep.mubr.f32.mxu0 0.0
      %984 = vmatmul.mubr.f32.gmra.mrb[0].mxu0 %v884
      %v985 = vpop.f32.mrb[0].mxu0
      %v986 = vadd.f32 0.0, %v985
      %v987 = vpop.f32.mrb[0].mxu0
      %988 = vmatprep.mubr.f32.mxu0 0.0
      %989 = vmatmul.mubr.f32.gmra.mrb[0].mxu0 %v887
      %v990 = vpop.f32.mrb[0].mxu0
      %v991 = vadd.f32 0.0, %v990
      %v992 = vpop.f32.mrb[0].mxu0
      %993 = vdwg.mxu0
      %v994 = vadd.f32 %v857, %v956
      %v995 = vadd.f32 %v858, %v961
      %v996 = vadd.f32 %v859, %v966
      %v997 = vadd.f32 %v860, %v971
      %v998 = vadd.f32 %v861, %v976
      %v999 = vadd.f32 %v862, %v981
      %v1000 = vadd.f32 %v863, %v986
      %v1001 = vadd.f32 %v864, %v991
      %v1002 = vmax.f32 %v994, 0.0
      %v1003 = vmax.f32 %v995, 0.0
      %v1004 = vmax.f32 %v996, 0.0
      %v1005 = vmax.f32 %v997, 0.0
      %v1006 = vmax.f32 %v998, 0.0
      %v1007 = vmax.f32 %v999, 0.0
      %v1008 = vmax.f32 %v1000, 0.0
      %v1009 = vmax.f32 %v1001, 0.0
      %v1010 = vpack.c.bf16 %v1003, %v1002
      %v1011 = vpack.c.bf16 %v1005, %v1004
      %v1012 = vpack.c.bf16 %v1007, %v1006
      %v1013 = vpack.c.bf16 %v1009, %v1008
      %v1014 = vld [vmem:[%s3] sm:$0xff]
      %v1015 = vld [vmem:[%s3 + $0x8] sm:$0xf]
      %v1016 = vld [vmem:[%s3 + $0xc] sm:$0xff]
      %v1017 = vld [vmem:[%s3 + $0x14] sm:$0xf]
      %v1018 = vld [vmem:[%s3 + $0x18] sm:$0xff]
      %v1019 = vld [vmem:[%s3 + $0x20] sm:$0xf]
      %v1020 = vld [vmem:[%s3 + $0x24] sm:$0xff]
      %v1021 = vld [vmem:[%s3 + $0x2c] sm:$0xf]
      %v1022 = vld [vmem:[%s3 + $0x30] sm:$0xff]
      %v1023 = vld [vmem:[%s3 + $0x38] sm:$0xf]
      %v1024 = vld [vmem:[%s3 + $0x3c] sm:$0xff]
      %v1025 = vld [vmem:[%s3 + $0x44] sm:$0xf]
      %v1026 = vld [vmem:[%s3 + $0x48] sm:$0xff]
      %v1027 = vld [vmem:[%s3 + $0x50] sm:$0xf]
      %v1028 = vld [vmem:[%s3 + $0x54] sm:$0xff]
      %v1029 = vld [vmem:[%s3 + $0x5c] sm:$0xf]
      %v1030 = vld [vmem:[%s3 + $0x60] sm:$0xff]
      %v1031 = vld [vmem:[%s3 + $0x68] sm:$0xf]
      %v1032 = vld [vmem:[%s3 + $0x6c] sm:$0xff]
      %v1033 = vld [vmem:[%s3 + $0x74] sm:$0xf]
      %v1034 = vld [vmem:[%s3 + $0x78] sm:$0xff]
      %v1035 = vld [vmem:[%s3 + $0x80] sm:$0xf]
      %v1036 = vld [vmem:[%s3 + $0x84] sm:$0xff]
      %v1037 = vld [vmem:[%s3 + $0x8c] sm:$0xf]
      %v1038 = vld [vmem:[%s3 + $0x90] sm:$0xff]
      %v1039 = vld [vmem:[%s3 + $0x98] sm:$0xf]
      %v1040 = vld [vmem:[%s3 + $0x9c] sm:$0xff]
      %v1041 = vld [vmem:[%s3 + $0xa4] sm:$0xf]
      %v1042 = vld [vmem:[%s3 + $0xa8] sm:$0xff]
      %v1043 = vld [vmem:[%s3 + $0xb0] sm:$0xf]
      %v1044 = vld [vmem:[%s3 + $0xb4] sm:$0xff]
      %v1045 = vld [vmem:[%s3 + $0xbc] sm:$0xf]
      %v1078 = vunpack.c.l.b16 %v1014
      %v1079 = vunpack.c.h.b16 %v1014
      %v1080 = vunpack.c.l.b16 %v1015
      %v1081 = vunpack.c.l.b16 %v1016
      %v1082 = vunpack.c.h.b16 %v1016
      %v1083 = vunpack.c.l.b16 %v1017
      %v1084 = vunpack.c.l.b16 %v1018
      %v1085 = vunpack.c.h.b16 %v1018
      %v1086 = vunpack.c.l.b16 %v1019
      %v1087 = vunpack.c.l.b16 %v1020
      %v1088 = vunpack.c.h.b16 %v1020
      %v1089 = vunpack.c.l.b16 %v1021
      %v1090 = vunpack.c.l.b16 %v1022
      %v1091 = vunpack.c.h.b16 %v1022
      %v1092 = vunpack.c.l.b16 %v1023
      %v1093 = vunpack.c.l.b16 %v1024
      %v1094 = vunpack.c.h.b16 %v1024
      %v1095 = vunpack.c.l.b16 %v1025
      %v1096 = vunpack.c.l.b16 %v1026
      %v1097 = vunpack.c.h.b16 %v1026
      %v1098 = vunpack.c.l.b16 %v1027
      %v1099 = vunpack.c.l.b16 %v1028
      %v1100 = vunpack.c.h.b16 %v1028
      %v1101 = vunpack.c.l.b16 %v1029
      %v1102 = vunpack.c.l.b16 %v1030
      %v1103 = vunpack.c.h.b16 %v1030
      %v1104 = vunpack.c.l.b16 %v1031
      %v1105 = vunpack.c.l.b16 %v1032
      %v1106 = vunpack.c.h.b16 %v1032
      %v1107 = vunpack.c.l.b16 %v1033
      %v1108 = vunpack.c.l.b16 %v1034
      %v1109 = vunpack.c.h.b16 %v1034
      %v1110 = vunpack.c.l.b16 %v1035
      %v1111 = vunpack.c.l.b16 %v1036
      %v1112 = vunpack.c.h.b16 %v1036
      %v1113 = vunpack.c.l.b16 %v1037
      %v1114 = vunpack.c.l.b16 %v1038
      %v1115 = vunpack.c.h.b16 %v1038
      %v1116 = vunpack.c.l.b16 %v1039
      %v1117 = vunpack.c.l.b16 %v1040
      %v1118 = vunpack.c.h.b16 %v1040
      %v1119 = vunpack.c.l.b16 %v1041
      %v1120 = vunpack.c.l.b16 %v1042
      %v1121 = vunpack.c.h.b16 %v1042
      %v1122 = vunpack.c.l.b16 %v1043
      %v1123 = vunpack.c.l.b16 %v1044
      %v1124 = vunpack.c.h.b16 %v1044
      %v1125 = vunpack.c.l.b16 %v1045
      %v1126 = vpack.c.b16 %v1081, %v1078
      %v1127 = vpack.c.b16 %v1082, %v1079
      %v1128 = vpack.c.b16 %v1083, %v1080
      %v1129 = vpack.c.b16 %v1087, %v1084
      %v1130 = vpack.c.b16 %v1088, %v1085
      %v1131 = vpack.c.b16 %v1089, %v1086
      %v1132 = vpack.c.b16 %v1093, %v1090
      %v1133 = vpack.c.b16 %v1094, %v1091
      %v1134 = vpack.c.b16 %v1095, %v1092
      %v1135 = vpack.c.b16 %v1099, %v1096
      %v1136 = vpack.c.b16 %v1100, %v1097
      %v1137 = vpack.c.b16 %v1101, %v1098
      %v1138 = vpack.c.b16 %v1105, %v1102
      %v1139 = vpack.c.b16 %v1106, %v1103
      %v1140 = vpack.c.b16 %v1107, %v1104
      %v1141 = vpack.c.b16 %v1111, %v1108
      %v1142 = vpack.c.b16 %v1112, %v1109
      %v1143 = vpack.c.b16 %v1113, %v1110
      %v1144 = vpack.c.b16 %v1117, %v1114
      %v1145 = vpack.c.b16 %v1118, %v1115
      %v1146 = vpack.c.b16 %v1119, %v1116
      %v1147 = vpack.c.b16 %v1123, %v1120
      %v1148 = vpack.c.b16 %v1124, %v1121
      %v1149 = vpack.c.b16 %v1125, %v1122
      %1174 = vmatprep.subr.bf16.mxu0 %v1127
      %1175 = vmatpush1.bf16.msra.mxu0 %v1126
      %1176 = vmatprep.subr.bf16.mxu0 %v1130
      %1177 = vmatpush1.bf16.msra.mxu0 %v1129
      %1178 = vmatprep.subr.bf16.mxu0 %v1133
      %1179 = vmatpush1.bf16.msra.mxu0 %v1132
      %1180 = vmatprep.subr.bf16.mxu0 %v1136
      %1181 = vmatpush1.bf16.msra.mxu0 %v1135
      %1182 = vmatprep.subr.bf16.mxu0 %v1139
      %1183 = vmatpush1.bf16.msra.mxu0 %v1138
      %1184 = vmatprep.subr.bf16.mxu0 %v1142
      %1185 = vmatpush1.bf16.msra.mxu0 %v1141
      %1186 = vmatprep.subr.bf16.mxu0 %v1145
      %1187 = vmatpush1.bf16.msra.mxu0 %v1144
      %1188 = vmatprep.subr.bf16.mxu0 %v1148
      %1189 = vmatpush1.bf16.msra.mxu0 %v1147
      %1190 = vmatprep.subr.bf16.mxu0 0
      %1191 = vmatpush1.bf16.msra.mxu0 0
      %1192 = vmatprep.subr.bf16.mxu0 0
      %1193 = vmatpush1.bf16.msra.mxu0 0
      %1194 = vmatprep.subr.bf16.mxu0 0
      %1195 = vmatpush1.bf16.msra.mxu0 0
      %1196 = vmatprep.subr.bf16.mxu0 0
      %1197 = vmatpush1.bf16.msra.mxu0 0
      %1198 = vmatprep.subr.bf16.mxu0 0
      %1199 = vmatpush1.bf16.msra.mxu0 0
      %1200 = vmatprep.subr.bf16.mxu0 0
      %1201 = vmatpush1.bf16.msra.mxu0 0
      %1202 = vmatprep.subr.bf16.mxu0 0
      %1203 = vmatpush1.bf16.msra.mxu0 0
      %1204 = vmatprep.subr.bf16.mxu0 0
      %1205 = vmatpush1.bf16.msra.mxu0 0
      %1206 = vmatprep.mubr.bf16.mxu0 0
      %1207 = vmatmul.mubr.bf16.gmra.mrb[0].mxu0 %v1010
      %v1208 = vpop.f32.mrb[0].mxu0
      %v1209 = vadd.f32 0.0, %v1208
      %v1210 = vpop.f32.mrb[0].mxu0
      %v1211 = vadd.f32 0.0, %v1210
      %v1212 = vpop.f32.mrb[0].mxu0
      %v1213 = vadd.f32 0.0, %v1212
      %v1214 = vpop.f32.mrb[0].mxu0
      %v1215 = vadd.f32 0.0, %v1214
      %1216 = vmatprep.mubr.bf16.mxu0 0
      %1217 = vmatmul.mubr.bf16.gmra.mrb[0].mxu0 %v1011
      %v1218 = vpop.f32.mrb[0].mxu0
      %v1219 = vadd.f32 0.0, %v1218
      %v1220 = vpop.f32.mrb[0].mxu0
      %v1221 = vadd.f32 0.0, %v1220
      %v1222 = vpop.f32.mrb[0].mxu0
      %v1223 = vadd.f32 0.0, %v1222
      %v1224 = vpop.f32.mrb[0].mxu0
      %v1225 = vadd.f32 0.0, %v1224
      %1226 = vmatprep.mubr.bf16.mxu0 0
      %1227 = vmatmul.mubr.bf16.gmra.mrb[0].mxu0 %v1012
      %v1228 = vpop.f32.mrb[0].mxu0
      %v1229 = vadd.f32 0.0, %v1228
      %v1230 = vpop.f32.mrb[0].mxu0
      %v1231 = vadd.f32 0.0, %v1230
      %v1232 = vpop.f32.mrb[0].mxu0
      %v1233 = vadd.f32 0.0, %v1232
      %v1234 = vpop.f32.mrb[0].mxu0
      %v1235 = vadd.f32 0.0, %v1234
      %1236 = vmatprep.mubr.bf16.mxu0 0
      %1237 = vmatmul.mubr.bf16.gmra.mrb[0].mxu0 %v1013
      %v1238 = vpop.f32.mrb[0].mxu0
      %v1239 = vadd.f32 0.0, %v1238
      %v1240 = vpop.f32.mrb[0].mxu0
      %v1241 = vadd.f32 0.0, %v1240
      %v1242 = vpop.f32.mrb[0].mxu0
      %v1243 = vadd.f32 0.0, %v1242
      %v1244 = vpop.f32.mrb[0].mxu0
      %v1245 = vadd.f32 0.0, %v1244
      %1246 = vdwg.mxu0
      %1247 = vmatprep.subr.bf16.mxu0 0
      %1248 = vmatpush1.bf16.msra.mxu0 %v1128
      %1249 = vmatprep.subr.bf16.mxu0 0
      %1250 = vmatpush1.bf16.msra.mxu0 %v1131
      %1251 = vmatprep.subr.bf16.mxu0 0
      %1252 = vmatpush1.bf16.msra.mxu0 %v1134
      %1253 = vmatprep.subr.bf16.mxu0 0
      %1254 = vmatpush1.bf16.msra.mxu0 %v1137
      %1255 = vmatprep.subr.bf16.mxu0 0
      %1256 = vmatpush1.bf16.msra.mxu0 %v1140
      %1257 = vmatprep.subr.bf16.mxu0 0
      %1258 = vmatpush1.bf16.msra.mxu0 %v1143
      %1259 = vmatprep.subr.bf16.mxu0 0
      %1260 = vmatpush1.bf16.msra.mxu0 %v1146
      %1261 = vmatprep.subr.bf16.mxu0 0
      %1262 = vmatpush1.bf16.msra.mxu0 %v1149
      %1263 = vmatprep.subr.bf16.mxu0 0
      %1264 = vmatpush1.bf16.msra.mxu0 0
      %1265 = vmatprep.subr.bf16.mxu0 0
      %1266 = vmatpush1.bf16.msra.mxu0 0
      %1267 = vmatprep.subr.bf16.mxu0 0
      %1268 = vmatpush1.bf16.msra.mxu0 0
      %1269 = vmatprep.subr.bf16.mxu0 0
      %1270 = vmatpush1.bf16.msra.mxu0 0
      %1271 = vmatprep.subr.bf16.mxu0 0
      %1272 = vmatpush1.bf16.msra.mxu0 0
      %1273 = vmatprep.subr.bf16.mxu0 0
      %1274 = vmatpush1.bf16.msra.mxu0 0
      %1275 = vmatprep.subr.bf16.mxu0 0
      %1276 = vmatpush1.bf16.msra.mxu0 0
      %1277 = vmatprep.subr.bf16.mxu0 0
      %1278 = vmatpush1.bf16.msra.mxu0 0
      %1279 = vmatprep.mubr.bf16.mxu0 0
      %1280 = vmatmul.mubr.bf16.gmra.mrb[0].mxu0 %v1010
      %v1281 = vpop.f32.mrb[0].mxu0
      %v1282 = vadd.f32 0.0, %v1281
      %v1283 = vpop.f32.mrb[0].mxu0
      %v1284 = vpop.f32.mrb[0].mxu0
      %v1285 = vadd.f32 0.0, %v1284
      %v1286 = vpop.f32.mrb[0].mxu0
      %1287 = vmatprep.mubr.bf16.mxu0 0
      %1288 = vmatmul.mubr.bf16.gmra.mrb[0].mxu0 %v1011
      %v1289 = vpop.f32.mrb[0].mxu0
      %v1290 = vadd.f32 0.0, %v1289
      %v1291 = vpop.f32.mrb[0].mxu0
      %v1292 = vpop.f32.mrb[0].mxu0
      %v1293 = vadd.f32 0.0, %v1292
      %v1294 = vpop.f32.mrb[0].mxu0
      %1295 = vmatprep.mubr.bf16.mxu0 0
      %1296 = vmatmul.mubr.bf16.gmra.mrb[0].mxu0 %v1012
      %v1297 = vpop.f32.mrb[0].mxu0
      %v1298 = vadd.f32 0.0, %v1297
      %v1299 = vpop.f32.mrb[0].mxu0
      %v1300 = vpop.f32.mrb[0].mxu0
      %v1301 = vadd.f32 0.0, %v1300
      %v1302 = vpop.f32.mrb[0].mxu0
      %1303 = vmatprep.mubr.bf16.mxu0 0
      %1304 = vmatmul.mubr.bf16.gmra.mrb[0].mxu0 %v1013
      %v1305 = vpop.f32.mrb[0].mxu0
      %v1306 = vadd.f32 0.0, %v1305
      %v1307 = vpop.f32.mrb[0].mxu0
      %v1308 = vpop.f32.mrb[0].mxu0
      %v1309 = vadd.f32 0.0, %v1308
      %v1310 = vpop.f32.mrb[0].mxu0
      %1311 = vdwg.mxu0
      %v1312 = vld [vmem:[%s4] sm:$0x1]
      %v1314 = vlaneseq
      %v1315 = vshrl.u32 %v1314, 7
      %v1316 = vsub.s32 0, %v1315
      %v1317 = vrot.slane %v1312, %v1316
      %v1319 = vadd.f32 %v1211, %v1317
      %v1320 = vadd.f32 %v1215, %v1317
      %v1321 = vadd.f32 %v1221, %v1317
      %v1322 = vadd.f32 %v1225, %v1317
      %v1323 = vadd.f32 %v1231, %v1317
      %v1324 = vadd.f32 %v1235, %v1317
      %v1325 = vadd.f32 %v1241, %v1317
      %v1326 = vadd.f32 %v1245, %v1317
      %1327 = vmatprep.subr.mxu0 0.0
      %1328 = vmatpush1.msra.mxu0 %v1209
      %1329 = vmatprep.subr.mxu0 0.0
      %1330 = vmatpush1.msra.mxu0 %v1213
      %1331 = vmatprep.subr.mxu0 0.0
      %1332 = vmatpush1.msra.mxu0 %v1219
      %1333 = vmatprep.subr.mxu0 0.0
      %1334 = vmatpush1.msra.mxu0 %v1223
      %1335 = vmatprep.subr.mxu0 0.0
      %1336 = vmatpush1.msra.mxu0 %v1229
      %1337 = vmatprep.subr.mxu0 0.0
      %1338 = vmatpush1.msra.mxu0 %v1233
      %1339 = vmatprep.subr.mxu0 0.0
      %1340 = vmatpush1.msra.mxu0 %v1239
      %1341 = vmatprep.subr.mxu0 0.0
      %1342 = vmatpush1.msra.mxu0 %v1243
      %1343 = vmatprep.subr.mxu0 0.0
      %1344 = vmatpush1.msra.mxu0 0.0
      %1345 = vmatprep.subr.mxu0 0.0
      %1346 = vmatpush1.msra.mxu0 0.0
      %1347 = vmatprep.subr.mxu0 0.0
      %1348 = vmatpush1.msra.mxu0 0.0
      %1349 = vmatprep.subr.mxu0 0.0
      %1350 = vmatpush1.msra.mxu0 0.0
      %1351 = vmatprep.subr.mxu0 0.0
      %1352 = vmatpush1.msra.mxu0 0.0
      %1353 = vmatprep.subr.mxu0 0.0
      %1354 = vmatpush1.msra.mxu0 0.0
      %1355 = vmatprep.subr.mxu0 0.0
      %1356 = vmatpush1.msra.mxu0 0.0
      %1357 = vmatprep.subr.mxu0 0.0
      %1358 = vmatpush1.msra.mxu0 0.0
      %1359 = vmatprep.subr.mxu0 0.0
      %1360 = vmatpush1.msra.mxu0 0.0
      %1361 = vmatprep.subr.mxu0 0.0
      %1362 = vmatpush1.msra.mxu0 0.0
      %1363 = vmatprep.subr.mxu0 0.0
      %1364 = vmatpush1.msra.mxu0 0.0
      %1365 = vmatprep.subr.mxu0 0.0
      %1366 = vmatpush1.msra.mxu0 0.0
      %1367 = vmatprep.subr.mxu0 0.0
      %1368 = vmatpush1.msra.mxu0 0.0
      %1369 = vmatprep.subr.mxu0 0.0
      %1370 = vmatpush1.msra.mxu0 0.0
      %1371 = vmatprep.subr.mxu0 0.0
      %1372 = vmatpush1.msra.mxu0 0.0
      %1373 = vmatprep.subr.mxu0 0.0
      %1374 = vmatpush1.msra.mxu0 0.0
      %1375 = vmatprep.subr.mxu0 0.0
      %1376 = vmatpush1.msra.mxu0 0.0
      %1377 = vmatprep.subr.mxu0 0.0
      %1378 = vmatpush1.msra.mxu0 0.0
      %1379 = vmatprep.subr.mxu0 0.0
      %1380 = vmatpush1.msra.mxu0 0.0
      %1381 = vmatprep.subr.mxu0 0.0
      %1382 = vmatpush1.msra.mxu0 0.0
      %1383 = vmatprep.subr.mxu0 0.0
      %1384 = vmatpush1.msra.mxu0 0.0
      %1385 = vmatprep.subr.mxu0 0.0
      %1386 = vmatpush1.msra.mxu0 0.0
      %1387 = vmatprep.subr.mxu0 0.0
      %1388 = vmatpush1.msra.mxu0 0.0
      %1389 = vmatprep.subr.mxu0 0.0
      %1390 = vmatpush1.msra.mxu0 0.0
      %1391 = vmatprep.mubr.f32.mxu0 0.0
      %1392 = vmatmul.mubr.f32.gmra.mrb[0].mxu0 %v729
      %v1393 = vpop.f32.mrb[0].mxu0
      %v1394 = vadd.f32 0.0, %v1393
      %v1395 = vpop.f32.mrb[0].mxu0
      %1396 = vmatprep.mubr.f32.mxu0 0.0
      %1397 = vmatmul.mubr.f32.gmra.mrb[0].mxu0 %v732
      %v1398 = vpop.f32.mrb[0].mxu0
      %v1399 = vadd.f32 0.0, %v1398
      %v1400 = vpop.f32.mrb[0].mxu0
      %1401 = vmatprep.mubr.f32.mxu0 0.0
      %1402 = vmatmul.mubr.f32.gmra.mrb[0].mxu0 %v735
      %v1403 = vpop.f32.mrb[0].mxu0
      %v1404 = vadd.f32 0.0, %v1403
      %v1405 = vpop.f32.mrb[0].mxu0
      %1406 = vmatprep.mubr.f32.mxu0 0.0
      %1407 = vmatmul.mubr.f32.gmra.mrb[0].mxu0 %v738
      %v1408 = vpop.f32.mrb[0].mxu0
      %v1409 = vadd.f32 0.0, %v1408
      %v1410 = vpop.f32.mrb[0].mxu0
      %1411 = vmatprep.mubr.f32.mxu0 0.0
      %1412 = vmatmul.mubr.f32.gmra.mrb[0].mxu0 %v741
      %v1413 = vpop.f32.mrb[0].mxu0
      %v1414 = vadd.f32 0.0, %v1413
      %v1415 = vpop.f32.mrb[0].mxu0
      %1416 = vmatprep.mubr.f32.mxu0 0.0
      %1417 = vmatmul.mubr.f32.gmra.mrb[0].mxu0 %v744
      %v1418 = vpop.f32.mrb[0].mxu0
      %v1419 = vadd.f32 0.0, %v1418
      %v1420 = vpop.f32.mrb[0].mxu0
      %1421 = vmatprep.mubr.f32.mxu0 0.0
      %1422 = vmatmul.mubr.f32.gmra.mrb[0].mxu0 %v747
      %v1423 = vpop.f32.mrb[0].mxu0
      %v1424 = vadd.f32 0.0, %v1423
      %v1425 = vpop.f32.mrb[0].mxu0
      %1426 = vmatprep.mubr.f32.mxu0 0.0
      %1427 = vmatmul.mubr.f32.gmra.mrb[0].mxu0 %v750
      %v1428 = vpop.f32.mrb[0].mxu0
      %v1429 = vadd.f32 0.0, %v1428
      %v1430 = vpop.f32.mrb[0].mxu0
      %1431 = vdwg.mxu0
      %v1432 = vadd.f32 %v1319, %v1394
      %v1433 = vadd.f32 %v1320, %v1399
      %v1434 = vadd.f32 %v1321, %v1404
      %v1435 = vadd.f32 %v1322, %v1409
      %v1436 = vadd.f32 %v1323, %v1414
      %v1437 = vadd.f32 %v1324, %v1419
      %v1438 = vadd.f32 %v1325, %v1424
      %v1439 = vadd.f32 %v1326, %v1429
      %1440 = vmatprep.subr.mxu0 0.0
      %1441 = vmatpush1.msra.mxu0 %v1282
      %1442 = vmatprep.subr.mxu0 0.0
      %1443 = vmatpush1.msra.mxu0 %v1285
      %1444 = vmatprep.subr.mxu0 0.0
      %1445 = vmatpush1.msra.mxu0 %v1290
      %1446 = vmatprep.subr.mxu0 0.0
      %1447 = vmatpush1.msra.mxu0 %v1293
      %1448 = vmatprep.subr.mxu0 0.0
      %1449 = vmatpush1.msra.mxu0 %v1298
      %1450 = vmatprep.subr.mxu0 0.0
      %1451 = vmatpush1.msra.mxu0 %v1301
      %1452 = vmatprep.subr.mxu0 0.0
      %1453 = vmatpush1.msra.mxu0 %v1306
      %1454 = vmatprep.subr.mxu0 0.0
      %1455 = vmatpush1.msra.mxu0 %v1309
      %1456 = vmatprep.subr.mxu0 0.0
      %1457 = vmatpush1.msra.mxu0 0.0
      %1458 = vmatprep.subr.mxu0 0.0
      %1459 = vmatpush1.msra.mxu0 0.0
      %1460 = vmatprep.subr.mxu0 0.0
      %1461 = vmatpush1.msra.mxu0 0.0
      %1462 = vmatprep.subr.mxu0 0.0
      %1463 = vmatpush1.msra.mxu0 0.0
      %1464 = vmatprep.subr.mxu0 0.0
      %1465 = vmatpush1.msra.mxu0 0.0
      %1466 = vmatprep.subr.mxu0 0.0
      %1467 = vmatpush1.msra.mxu0 0.0
      %1468 = vmatprep.subr.mxu0 0.0
      %1469 = vmatpush1.msra.mxu0 0.0
      %1470 = vmatprep.subr.mxu0 0.0
      %1471 = vmatpush1.msra.mxu0 0.0
      %1472 = vmatprep.subr.mxu0 0.0
      %1473 = vmatpush1.msra.mxu0 0.0
      %1474 = vmatprep.subr.mxu0 0.0
      %1475 = vmatpush1.msra.mxu0 0.0
      %1476 = vmatprep.subr.mxu0 0.0
      %1477 = vmatpush1.msra.mxu0 0.0
      %1478 = vmatprep.subr.mxu0 0.0
      %1479 = vmatpush1.msra.mxu0 0.0
      %1480 = vmatprep.subr.mxu0 0.0
      %1481 = vmatpush1.msra.mxu0 0.0
      %1482 = vmatprep.subr.mxu0 0.0
      %1483 = vmatpush1.msra.mxu0 0.0
      %1484 = vmatprep.subr.mxu0 0.0
      %1485 = vmatpush1.msra.mxu0 0.0
      %1486 = vmatprep.subr.mxu0 0.0
      %1487 = vmatpush1.msra.mxu0 0.0
      %1488 = vmatprep.subr.mxu0 0.0
      %1489 = vmatpush1.msra.mxu0 0.0
      %1490 = vmatprep.subr.mxu0 0.0
      %1491 = vmatpush1.msra.mxu0 0.0
      %1492 = vmatprep.subr.mxu0 0.0
      %1493 = vmatpush1.msra.mxu0 0.0
      %1494 = vmatprep.subr.mxu0 0.0
      %1495 = vmatpush1.msra.mxu0 0.0
      %1496 = vmatprep.subr.mxu0 0.0
      %1497 = vmatpush1.msra.mxu0 0.0
      %1498 = vmatprep.subr.mxu0 0.0
      %1499 = vmatpush1.msra.mxu0 0.0
      %1500 = vmatprep.subr.mxu0 0.0
      %1501 = vmatpush1.msra.mxu0 0.0
      %1502 = vmatprep.subr.mxu0 0.0
      %1503 = vmatpush1.msra.mxu0 0.0
      %1504 = vmatprep.mubr.f32.mxu0 0.0
      %1505 = vmatmul.mubr.f32.gmra.mrb[0].mxu0 %v866
      %v1506 = vpop.f32.mrb[0].mxu0
      %v1507 = vadd.f32 0.0, %v1506
      %v1508 = vpop.f32.mrb[0].mxu0
      %1509 = vmatprep.mubr.f32.mxu0 0.0
      %1510 = vmatmul.mubr.f32.gmra.mrb[0].mxu0 %v869
      %v1511 = vpop.f32.mrb[0].mxu0
      %v1512 = vadd.f32 0.0, %v1511
      %v1513 = vpop.f32.mrb[0].mxu0
      %1514 = vmatprep.mubr.f32.mxu0 0.0
      %1515 = vmatmul.mubr.f32.gmra.mrb[0].mxu0 %v872
      %v1516 = vpop.f32.mrb[0].mxu0
      %v1517 = vadd.f32 0.0, %v1516
      %v1518 = vpop.f32.mrb[0].mxu0
      %1519 = vmatprep.mubr.f32.mxu0 0.0
      %1520 = vmatmul.mubr.f32.gmra.mrb[0].mxu0 %v875
      %v1521 = vpop.f32.mrb[0].mxu0
      %v1522 = vadd.f32 0.0, %v1521
      %v1523 = vpop.f32.mrb[0].mxu0
      %1524 = vmatprep.mubr.f32.mxu0 0.0
      %1525 = vmatmul.mubr.f32.gmra.mrb[0].mxu0 %v878
      %v1526 = vpop.f32.mrb[0].mxu0
      %v1527 = vadd.f32 0.0, %v1526
      %v1528 = vpop.f32.mrb[0].mxu0
      %1529 = vmatprep.mubr.f32.mxu0 0.0
      %1530 = vmatmul.mubr.f32.gmra.mrb[0].mxu0 %v881
      %v1531 = vpop.f32.mrb[0].mxu0
      %v1532 = vadd.f32 0.0, %v1531
      %v1533 = vpop.f32.mrb[0].mxu0
      %1534 = vmatprep.mubr.f32.mxu0 0.0
      %1535 = vmatmul.mubr.f32.gmra.mrb[0].mxu0 %v884
      %v1536 = vpop.f32.mrb[0].mxu0
      %v1537 = vadd.f32 0.0, %v1536
      %v1538 = vpop.f32.mrb[0].mxu0
      %1539 = vmatprep.mubr.f32.mxu0 0.0
      %1540 = vmatmul.mubr.f32.gmra.mrb[0].mxu0 %v887
      %v1541 = vpop.f32.mrb[0].mxu0
      %v1542 = vadd.f32 0.0, %v1541
      %v1543 = vpop.f32.mrb[0].mxu0
      %1544 = vdwg.mxu0
      %v1545 = vadd.f32 %v1432, %v1507
      %v1546 = vadd.f32 %v1433, %v1512
      %v1547 = vadd.f32 %v1434, %v1517
      %v1548 = vadd.f32 %v1435, %v1522
      %v1549 = vadd.f32 %v1436, %v1527
      %v1550 = vadd.f32 %v1437, %v1532
      %v1551 = vadd.f32 %v1438, %v1537
      %v1552 = vadd.f32 %v1439, %v1542
      %v1553 = vadd.f32 %v1545, %v402
      %v1554 = vadd.f32 %v1546, %v403
      %v1555 = vadd.f32 %v1547, %v404
      %v1556 = vadd.f32 %v1548, %v405
      %v1557 = vadd.f32 %v1549, %v406
      %v1558 = vadd.f32 %v1550, %v407
      %v1559 = vadd.f32 %v1551, %v408
      %v1560 = vadd.f32 %v1552, %v409
      %v1561 = vmax.f32 %v1553, 0.0
      %v1562 = vmax.f32 %v1554, 0.0
      %v1563 = vmax.f32 %v1555, 0.0
      %v1564 = vmax.f32 %v1556, 0.0
      %v1565 = vmax.f32 %v1557, 0.0
      %v1566 = vmax.f32 %v1558, 0.0
      %v1567 = vmax.f32 %v1559, 0.0
      %v1568 = vmax.f32 %v1560, 0.0
      %1569 = vst [vmem:[%s226] sm:$0xff] %v1561
      %1570 = vst [vmem:[%s226 + $0x8] sm:$0xff] %v1562
      %1571 = vst [vmem:[%s226 + $0x10] sm:$0xff] %v1563
      %1572 = vst [vmem:[%s226 + $0x18] sm:$0xff] %v1564
      %1573 = vst [vmem:[%s226 + $0x20] sm:$0xff] %v1565
      %1574 = vst [vmem:[%s226 + $0x28] sm:$0xff] %v1566
      %1575 = vst [vmem:[%s226 + $0x30] sm:$0xff] %v1567
      %1576 = vst [vmem:[%s226 + $0x38] sm:$0xff] %v1568
      %v1577 = vld [vmem:[%s220 + $0x40] sm:$0xff]
      %v1578 = vld [vmem:[%s220 + $0x48] sm:$0xff]
      %v1579 = vld [vmem:[%s220 + $0x50] sm:$0xff]
      %v1580 = vld [vmem:[%s220 + $0x58] sm:$0xff]
      %v1581 = vld [vmem:[%s220 + $0x60] sm:$0xff]
      %v1582 = vld [vmem:[%s220 + $0x68] sm:$0xff]
      %v1583 = vld [vmem:[%s220 + $0x70] sm:$0xff]
      %v1584 = vld [vmem:[%s220 + $0x78] sm:$0xff]
      %v1585 = vpack.c.bf16 %v1578, %v1577
      %v1586 = vpack.c.bf16 %v1580, %v1579
      %v1587 = vpack.c.bf16 %v1582, %v1581
      %v1588 = vpack.c.bf16 %v1584, %v1583
      %v1589 = vld [vmem:[%s1] sm:$0xff]
      %v1590 = vld [vmem:[%s1 + $0x8] sm:$0xf]
      %v1591 = vld [vmem:[%s1 + $0xc] sm:$0xff]
      %v1592 = vld [vmem:[%s1 + $0x14] sm:$0xf]
      %v1593 = vld [vmem:[%s1 + $0x18] sm:$0xff]
      %v1594 = vld [vmem:[%s1 + $0x20] sm:$0xf]
      %v1595 = vld [vmem:[%s1 + $0x24] sm:$0xff]
      %v1596 = vld [vmem:[%s1 + $0x2c] sm:$0xf]
      %v1597 = vld [vmem:[%s1 + $0x30] sm:$0xff]
      %v1598 = vld [vmem:[%s1 + $0x38] sm:$0xf]
      %v1599 = vld [vmem:[%s1 + $0x3c] sm:$0xff]
      %v1600 = vld [vmem:[%s1 + $0x44] sm:$0xf]
      %v1601 = vld [vmem:[%s1 + $0x48] sm:$0xff]
      %v1602 = vld [vmem:[%s1 + $0x50] sm:$0xf]
      %v1603 = vld [vmem:[%s1 + $0x54] sm:$0xff]
      %v1604 = vld [vmem:[%s1 + $0x5c] sm:$0xf]
      %v1605 = vld [vmem:[%s1 + $0x60] sm:$0xff]
      %v1606 = vld [vmem:[%s1 + $0x68] sm:$0xf]
      %v1607 = vld [vmem:[%s1 + $0x6c] sm:$0xff]
      %v1608 = vld [vmem:[%s1 + $0x74] sm:$0xf]
      %v1609 = vld [vmem:[%s1 + $0x78] sm:$0xff]
      %v1610 = vld [vmem:[%s1 + $0x80] sm:$0xf]
      %v1611 = vld [vmem:[%s1 + $0x84] sm:$0xff]
      %v1612 = vld [vmem:[%s1 + $0x8c] sm:$0xf]
      %v1613 = vld [vmem:[%s1 + $0x90] sm:$0xff]
      %v1614 = vld [vmem:[%s1 + $0x98] sm:$0xf]
      %v1615 = vld [vmem:[%s1 + $0x9c] sm:$0xff]
      %v1616 = vld [vmem:[%s1 + $0xa4] sm:$0xf]
      %v1617 = vld [vmem:[%s1 + $0xa8] sm:$0xff]
      %v1618 = vld [vmem:[%s1 + $0xb0] sm:$0xf]
      %v1619 = vld [vmem:[%s1 + $0xb4] sm:$0xff]
      %v1620 = vld [vmem:[%s1 + $0xbc] sm:$0xf]
      %v1653 = vunpack.c.l.b16 %v1589
      %v1654 = vunpack.c.h.b16 %v1589
      %v1655 = vunpack.c.l.b16 %v1590
      %v1656 = vunpack.c.l.b16 %v1591
      %v1657 = vunpack.c.h.b16 %v1591
      %v1658 = vunpack.c.l.b16 %v1592
      %v1659 = vunpack.c.l.b16 %v1593
      %v1660 = vunpack.c.h.b16 %v1593
      %v1661 = vunpack.c.l.b16 %v1594
      %v1662 = vunpack.c.l.b16 %v1595
      %v1663 = vunpack.c.h.b16 %v1595
      %v1664 = vunpack.c.l.b16 %v1596
      %v1665 = vunpack.c.l.b16 %v1597
      %v1666 = vunpack.c.h.b16 %v1597
      %v1667 = vunpack.c.l.b16 %v1598
      %v1668 = vunpack.c.l.b16 %v1599
      %v1669 = vunpack.c.h.b16 %v1599
      %v1670 = vunpack.c.l.b16 %v1600
      %v1671 = vunpack.c.l.b16 %v1601
      %v1672 = vunpack.c.h.b16 %v1601
      %v1673 = vunpack.c.l.b16 %v1602
      %v1674 = vunpack.c.l.b16 %v1603
      %v1675 = vunpack.c.h.b16 %v1603
      %v1676 = vunpack.c.l.b16 %v1604
      %v1677 = vunpack.c.l.b16 %v1605
      %v1678 = vunpack.c.h.b16 %v1605
      %v1679 = vunpack.c.l.b16 %v1606
      %v1680 = vunpack.c.l.b16 %v1607
      %v1681 = vunpack.c.h.b16 %v1607
      %v1682 = vunpack.c.l.b16 %v1608
      %v1683 = vunpack.c.l.b16 %v1609
      %v1684 = vunpack.c.h.b16 %v1609
      %v1685 = vunpack.c.l.b16 %v1610
      %v1686 = vunpack.c.l.b16 %v1611
      %v1687 = vunpack.c.h.b16 %v1611
      %v1688 = vunpack.c.l.b16 %v1612
      %v1689 = vunpack.c.l.b16 %v1613
      %v1690 = vunpack.c.h.b16 %v1613
      %v1691 = vunpack.c.l.b16 %v1614
      %v1692 = vunpack.c.l.b16 %v1615
      %v1693 = vunpack.c.h.b16 %v1615
      %v1694 = vunpack.c.l.b16 %v1616
      %v1695 = vunpack.c.l.b16 %v1617
      %v1696 = vunpack.c.h.b16 %v1617
      %v1697 = vunpack.c.l.b16 %v1618
      %v1698 = vunpack.c.l.b16 %v1619
      %v1699 = vunpack.c.h.b16 %v1619
      %v1700 = vunpack.c.l.b16 %v1620
      %v1701 = vpack.c.b16 %v1656, %v1653
      %v1702 = vpack.c.b16 %v1657, %v1654
      %v1703 = vpack.c.b16 %v1658, %v1655
      %v1704 = vpack.c.b16 %v1662, %v1659
      %v1705 = vpack.c.b16 %v1663, %v1660
      %v1706 = vpack.c.b16 %v1664, %v1661
      %v1707 = vpack.c.b16 %v1668, %v1665
      %v1708 = vpack.c.b16 %v1669, %v1666
      %v1709 = vpack.c.b16 %v1670, %v1667
      %v1710 = vpack.c.b16 %v1674, %v1671
      %v1711 = vpack.c.b16 %v1675, %v1672
      %v1712 = vpack.c.b16 %v1676, %v1673
      %v1713 = vpack.c.b16 %v1680, %v1677
      %v1714 = vpack.c.b16 %v1681, %v1678
      %v1715 = vpack.c.b16 %v1682, %v1679
      %v1716 = vpack.c.b16 %v1686, %v1683
      %v1717 = vpack.c.b16 %v1687, %v1684
      %v1718 = vpack.c.b16 %v1688, %v1685
      %v1719 = vpack.c.b16 %v1692, %v1689
      %v1720 = vpack.c.b16 %v1693, %v1690
      %v1721 = vpack.c.b16 %v1694, %v1691
      %v1722 = vpack.c.b16 %v1698, %v1695
      %v1723 = vpack.c.b16 %v1699, %v1696
      %v1724 = vpack.c.b16 %v1700, %v1697
      %1749 = vmatprep.subr.bf16.mxu0 %v1702
      %1750 = vmatpush1.bf16.msra.mxu0 %v1701
      %1751 = vmatprep.subr.bf16.mxu0 %v1705
      %1752 = vmatpush1.bf16.msra.mxu0 %v1704
      %1753 = vmatprep.subr.bf16.mxu0 %v1708
      %1754 = vmatpush1.bf16.msra.mxu0 %v1707
      %1755 = vmatprep.subr.bf16.mxu0 %v1711
      %1756 = vmatpush1.bf16.msra.mxu0 %v1710
      %1757 = vmatprep.subr.bf16.mxu0 %v1714
      %1758 = vmatpush1.bf16.msra.mxu0 %v1713
      %1759 = vmatprep.subr.bf16.mxu0 %v1717
      %1760 = vmatpush1.bf16.msra.mxu0 %v1716
      %1761 = vmatprep.subr.bf16.mxu0 %v1720
      %1762 = vmatpush1.bf16.msra.mxu0 %v1719
      %1763 = vmatprep.subr.bf16.mxu0 %v1723
      %1764 = vmatpush1.bf16.msra.mxu0 %v1722
      %1765 = vmatprep.subr.bf16.mxu0 0
      %1766 = vmatpush1.bf16.msra.mxu0 0
      %1767 = vmatprep.subr.bf16.mxu0 0
      %1768 = vmatpush1.bf16.msra.mxu0 0
      %1769 = vmatprep.subr.bf16.mxu0 0
      %1770 = vmatpush1.bf16.msra.mxu0 0
      %1771 = vmatprep.subr.bf16.mxu0 0
      %1772 = vmatpush1.bf16.msra.mxu0 0
      %1773 = vmatprep.subr.bf16.mxu0 0
      %1774 = vmatpush1.bf16.msra.mxu0 0
      %1775 = vmatprep.subr.bf16.mxu0 0
      %1776 = vmatpush1.bf16.msra.mxu0 0
      %1777 = vmatprep.subr.bf16.mxu0 0
      %1778 = vmatpush1.bf16.msra.mxu0 0
      %1779 = vmatprep.subr.bf16.mxu0 0
      %1780 = vmatpush1.bf16.msra.mxu0 0
      %1781 = vmatprep.mubr.bf16.mxu0 0
      %1782 = vmatmul.mubr.bf16.gmra.mrb[0].mxu0 %v1585
      %v1783 = vpop.f32.mrb[0].mxu0
      %v1784 = vadd.f32 0.0, %v1783
      %v1785 = vpop.f32.mrb[0].mxu0
      %v1786 = vadd.f32 0.0, %v1785
      %v1787 = vpop.f32.mrb[0].mxu0
      %v1788 = vadd.f32 0.0, %v1787
      %v1789 = vpop.f32.mrb[0].mxu0
      %v1790 = vadd.f32 0.0, %v1789
      %1791 = vmatprep.mubr.bf16.mxu0 0
      %1792 = vmatmul.mubr.bf16.gmra.mrb[0].mxu0 %v1586
      %v1793 = vpop.f32.mrb[0].mxu0
      %v1794 = vadd.f32 0.0, %v1793
      %v1795 = vpop.f32.mrb[0].mxu0
      %v1796 = vadd.f32 0.0, %v1795
      %v1797 = vpop.f32.mrb[0].mxu0
      %v1798 = vadd.f32 0.0, %v1797
      %v1799 = vpop.f32.mrb[0].mxu0
      %v1800 = vadd.f32 0.0, %v1799
      %1801 = vmatprep.mubr.bf16.mxu0 0
      %1802 = vmatmul.mubr.bf16.gmra.mrb[0].mxu0 %v1587
      %v1803 = vpop.f32.mrb[0].mxu0
      %v1804 = vadd.f32 0.0, %v1803
      %v1805 = vpop.f32.mrb[0].mxu0
      %v1806 = vadd.f32 0.0, %v1805
      %v1807 = vpop.f32.mrb[0].mxu0
      %v1808 = vadd.f32 0.0, %v1807
      %v1809 = vpop.f32.mrb[0].mxu0
      %v1810 = vadd.f32 0.0, %v1809
      %1811 = vmatprep.mubr.bf16.mxu0 0
      %1812 = vmatmul.mubr.bf16.gmra.mrb[0].mxu0 %v1588
      %v1813 = vpop.f32.mrb[0].mxu0
      %v1814 = vadd.f32 0.0, %v1813
      %v1815 = vpop.f32.mrb[0].mxu0
      %v1816 = vadd.f32 0.0, %v1815
      %v1817 = vpop.f32.mrb[0].mxu0
      %v1818 = vadd.f32 0.0, %v1817
      %v1819 = vpop.f32.mrb[0].mxu0
      %v1820 = vadd.f32 0.0, %v1819
      %1821 = vdwg.mxu0
      %1822 = vmatprep.subr.bf16.mxu0 0
      %1823 = vmatpush1.bf16.msra.mxu0 %v1703
      %1824 = vmatprep.subr.bf16.mxu0 0
      %1825 = vmatpush1.bf16.msra.mxu0 %v1706
      %1826 = vmatprep.subr.bf16.mxu0 0
      %1827 = vmatpush1.bf16.msra.mxu0 %v1709
      %1828 = vmatprep.subr.bf16.mxu0 0
      %1829 = vmatpush1.bf16.msra.mxu0 %v1712
      %1830 = vmatprep.subr.bf16.mxu0 0
      %1831 = vmatpush1.bf16.msra.mxu0 %v1715
      %1832 = vmatprep.subr.bf16.mxu0 0
      %1833 = vmatpush1.bf16.msra.mxu0 %v1718
      %1834 = vmatprep.subr.bf16.mxu0 0
      %1835 = vmatpush1.bf16.msra.mxu0 %v1721
      %1836 = vmatprep.subr.bf16.mxu0 0
      %1837 = vmatpush1.bf16.msra.mxu0 %v1724
      %1838 = vmatprep.subr.bf16.mxu0 0
      %1839 = vmatpush1.bf16.msra.mxu0 0
      %1840 = vmatprep.subr.bf16.mxu0 0
      %1841 = vmatpush1.bf16.msra.mxu0 0
      %1842 = vmatprep.subr.bf16.mxu0 0
      %1843 = vmatpush1.bf16.msra.mxu0 0
      %1844 = vmatprep.subr.bf16.mxu0 0
      %1845 = vmatpush1.bf16.msra.mxu0 0
      %1846 = vmatprep.subr.bf16.mxu0 0
      %1847 = vmatpush1.bf16.msra.mxu0 0
      %1848 = vmatprep.subr.bf16.mxu0 0
      %1849 = vmatpush1.bf16.msra.mxu0 0
      %1850 = vmatprep.subr.bf16.mxu0 0
      %1851 = vmatpush1.bf16.msra.mxu0 0
      %1852 = vmatprep.subr.bf16.mxu0 0
      %1853 = vmatpush1.bf16.msra.mxu0 0
      %1854 = vmatprep.mubr.bf16.mxu0 0
      %1855 = vmatmul.mubr.bf16.gmra.mrb[0].mxu0 %v1585
      %v1856 = vpop.f32.mrb[0].mxu0
      %v1857 = vadd.f32 0.0, %v1856
      %v1858 = vpop.f32.mrb[0].mxu0
      %v1859 = vpop.f32.mrb[0].mxu0
      %v1860 = vadd.f32 0.0, %v1859
      %v1861 = vpop.f32.mrb[0].mxu0
      %1862 = vmatprep.mubr.bf16.mxu0 0
      %1863 = vmatmul.mubr.bf16.gmra.mrb[0].mxu0 %v1586
      %v1864 = vpop.f32.mrb[0].mxu0
      %v1865 = vadd.f32 0.0, %v1864
      %v1866 = vpop.f32.mrb[0].mxu0
      %v1867 = vpop.f32.mrb[0].mxu0
      %v1868 = vadd.f32 0.0, %v1867
      %v1869 = vpop.f32.mrb[0].mxu0
      %1870 = vmatprep.mubr.bf16.mxu0 0
      %1871 = vmatmul.mubr.bf16.gmra.mrb[0].mxu0 %v1587
      %v1872 = vpop.f32.mrb[0].mxu0
      %v1873 = vadd.f32 0.0, %v1872
      %v1874 = vpop.f32.mrb[0].mxu0
      %v1875 = vpop.f32.mrb[0].mxu0
      %v1876 = vadd.f32 0.0, %v1875
      %v1877 = vpop.f32.mrb[0].mxu0
      %1878 = vmatprep.mubr.bf16.mxu0 0
      %1879 = vmatmul.mubr.bf16.gmra.mrb[0].mxu0 %v1588
      %v1880 = vpop.f32.mrb[0].mxu0
      %v1881 = vadd.f32 0.0, %v1880
      %v1882 = vpop.f32.mrb[0].mxu0
      %v1883 = vpop.f32.mrb[0].mxu0
      %v1884 = vadd.f32 0.0, %v1883
      %v1885 = vpop.f32.mrb[0].mxu0
      %1886 = vdwg.mxu0
      %v1887 = vld [vmem:[%s2] sm:$0x1]
      %v1889 = vlaneseq
      %v1890 = vshrl.u32 %v1889, 7
      %v1891 = vsub.s32 0, %v1890
      %v1892 = vrot.slane %v1887, %v1891
      %v1894 = vadd.f32 %v1786, %v1892
      %v1895 = vadd.f32 %v1790, %v1892
      %v1896 = vadd.f32 %v1796, %v1892
      %v1897 = vadd.f32 %v1800, %v1892
      %v1898 = vadd.f32 %v1806, %v1892
      %v1899 = vadd.f32 %v1810, %v1892
      %v1900 = vadd.f32 %v1816, %v1892
      %v1901 = vadd.f32 %v1820, %v1892
      %1902 = vmatprep.subr.mxu0 0.0
      %1903 = vmatpush1.msra.mxu0 %v1784
      %1904 = vmatprep.subr.mxu0 0.0
      %1905 = vmatpush1.msra.mxu0 %v1788
      %1906 = vmatprep.subr.mxu0 0.0
      %1907 = vmatpush1.msra.mxu0 %v1794
      %1908 = vmatprep.subr.mxu0 0.0
      %1909 = vmatpush1.msra.mxu0 %v1798
      %1910 = vmatprep.subr.mxu0 0.0
      %1911 = vmatpush1.msra.mxu0 %v1804
      %1912 = vmatprep.subr.mxu0 0.0
      %1913 = vmatpush1.msra.mxu0 %v1808
      %1914 = vmatprep.subr.mxu0 0.0
      %1915 = vmatpush1.msra.mxu0 %v1814
      %1916 = vmatprep.subr.mxu0 0.0
      %1917 = vmatpush1.msra.mxu0 %v1818
      %1918 = vmatprep.subr.mxu0 0.0
      %1919 = vmatpush1.msra.mxu0 0.0
      %1920 = vmatprep.subr.mxu0 0.0
      %1921 = vmatpush1.msra.mxu0 0.0
      %1922 = vmatprep.subr.mxu0 0.0
      %1923 = vmatpush1.msra.mxu0 0.0
      %1924 = vmatprep.subr.mxu0 0.0
      %1925 = vmatpush1.msra.mxu0 0.0
      %1926 = vmatprep.subr.mxu0 0.0
      %1927 = vmatpush1.msra.mxu0 0.0
      %1928 = vmatprep.subr.mxu0 0.0
      %1929 = vmatpush1.msra.mxu0 0.0
      %1930 = vmatprep.subr.mxu0 0.0
      %1931 = vmatpush1.msra.mxu0 0.0
      %1932 = vmatprep.subr.mxu0 0.0
      %1933 = vmatpush1.msra.mxu0 0.0
      %1934 = vmatprep.subr.mxu0 0.0
      %1935 = vmatpush1.msra.mxu0 0.0
      %1936 = vmatprep.subr.mxu0 0.0
      %1937 = vmatpush1.msra.mxu0 0.0
      %1938 = vmatprep.subr.mxu0 0.0
      %1939 = vmatpush1.msra.mxu0 0.0
      %1940 = vmatprep.subr.mxu0 0.0
      %1941 = vmatpush1.msra.mxu0 0.0
      %1942 = vmatprep.subr.mxu0 0.0
      %1943 = vmatpush1.msra.mxu0 0.0
      %1944 = vmatprep.subr.mxu0 0.0
      %1945 = vmatpush1.msra.mxu0 0.0
      %1946 = vmatprep.subr.mxu0 0.0
      %1947 = vmatpush1.msra.mxu0 0.0
      %1948 = vmatprep.subr.mxu0 0.0
      %1949 = vmatpush1.msra.mxu0 0.0
      %1950 = vmatprep.subr.mxu0 0.0
      %1951 = vmatpush1.msra.mxu0 0.0
      %1952 = vmatprep.subr.mxu0 0.0
      %1953 = vmatpush1.msra.mxu0 0.0
      %1954 = vmatprep.subr.mxu0 0.0
      %1955 = vmatpush1.msra.mxu0 0.0
      %1956 = vmatprep.subr.mxu0 0.0
      %1957 = vmatpush1.msra.mxu0 0.0
      %1958 = vmatprep.subr.mxu0 0.0
      %1959 = vmatpush1.msra.mxu0 0.0
      %1960 = vmatprep.subr.mxu0 0.0
      %1961 = vmatpush1.msra.mxu0 0.0
      %1962 = vmatprep.subr.mxu0 0.0
      %1963 = vmatpush1.msra.mxu0 0.0
      %1964 = vmatprep.subr.mxu0 0.0
      %1965 = vmatpush1.msra.mxu0 0.0
      %1966 = vmatprep.mubr.f32.mxu0 0.0
      %1967 = vmatmul.mubr.f32.gmra.mrb[0].mxu0 %v729
      %v1968 = vpop.f32.mrb[0].mxu0
      %v1969 = vadd.f32 0.0, %v1968
      %v1970 = vpop.f32.mrb[0].mxu0
      %1971 = vmatprep.mubr.f32.mxu0 0.0
      %1972 = vmatmul.mubr.f32.gmra.mrb[0].mxu0 %v732
      %v1973 = vpop.f32.mrb[0].mxu0
      %v1974 = vadd.f32 0.0, %v1973
      %v1975 = vpop.f32.mrb[0].mxu0
      %1976 = vmatprep.mubr.f32.mxu0 0.0
      %1977 = vmatmul.mubr.f32.gmra.mrb[0].mxu0 %v735
      %v1978 = vpop.f32.mrb[0].mxu0
      %v1979 = vadd.f32 0.0, %v1978
      %v1980 = vpop.f32.mrb[0].mxu0
      %1981 = vmatprep.mubr.f32.mxu0 0.0
      %1982 = vmatmul.mubr.f32.gmra.mrb[0].mxu0 %v738
      %v1983 = vpop.f32.mrb[0].mxu0
      %v1984 = vadd.f32 0.0, %v1983
      %v1985 = vpop.f32.mrb[0].mxu0
      %1986 = vmatprep.mubr.f32.mxu0 0.0
      %1987 = vmatmul.mubr.f32.gmra.mrb[0].mxu0 %v741
      %v1988 = vpop.f32.mrb[0].mxu0
      %v1989 = vadd.f32 0.0, %v1988
      %v1990 = vpop.f32.mrb[0].mxu0
      %1991 = vmatprep.mubr.f32.mxu0 0.0
      %1992 = vmatmul.mubr.f32.gmra.mrb[0].mxu0 %v744
      %v1993 = vpop.f32.mrb[0].mxu0
      %v1994 = vadd.f32 0.0, %v1993
      %v1995 = vpop.f32.mrb[0].mxu0
      %1996 = vmatprep.mubr.f32.mxu0 0.0
      %1997 = vmatmul.mubr.f32.gmra.mrb[0].mxu0 %v747
      %v1998 = vpop.f32.mrb[0].mxu0
      %v1999 = vadd.f32 0.0, %v1998
      %v2000 = vpop.f32.mrb[0].mxu0
      %2001 = vmatprep.mubr.f32.mxu0 0.0
      %2002 = vmatmul.mubr.f32.gmra.mrb[0].mxu0 %v750
      %v2003 = vpop.f32.mrb[0].mxu0
      %v2004 = vadd.f32 0.0, %v2003
      %v2005 = vpop.f32.mrb[0].mxu0
      %2006 = vdwg.mxu0
      %v2007 = vadd.f32 %v1894, %v1969
      %v2008 = vadd.f32 %v1895, %v1974
      %v2009 = vadd.f32 %v1896, %v1979
      %v2010 = vadd.f32 %v1897, %v1984
      %v2011 = vadd.f32 %v1898, %v1989
      %v2012 = vadd.f32 %v1899, %v1994
      %v2013 = vadd.f32 %v1900, %v1999
      %v2014 = vadd.f32 %v1901, %v2004
      %2015 = vmatprep.subr.mxu0 0.0
      %2016 = vmatpush1.msra.mxu0 %v1857
      %2017 = vmatprep.subr.mxu0 0.0
      %2018 = vmatpush1.msra.mxu0 %v1860
      %2019 = vmatprep.subr.mxu0 0.0
      %2020 = vmatpush1.msra.mxu0 %v1865
      %2021 = vmatprep.subr.mxu0 0.0
      %2022 = vmatpush1.msra.mxu0 %v1868
      %2023 = vmatprep.subr.mxu0 0.0
      %2024 = vmatpush1.msra.mxu0 %v1873
      %2025 = vmatprep.subr.mxu0 0.0
      %2026 = vmatpush1.msra.mxu0 %v1876
      %2027 = vmatprep.subr.mxu0 0.0
      %2028 = vmatpush1.msra.mxu0 %v1881
      %2029 = vmatprep.subr.mxu0 0.0
      %2030 = vmatpush1.msra.mxu0 %v1884
      %2031 = vmatprep.subr.mxu0 0.0
      %2032 = vmatpush1.msra.mxu0 0.0
      %2033 = vmatprep.subr.mxu0 0.0
      %2034 = vmatpush1.msra.mxu0 0.0
      %2035 = vmatprep.subr.mxu0 0.0
      %2036 = vmatpush1.msra.mxu0 0.0
      %2037 = vmatprep.subr.mxu0 0.0
      %2038 = vmatpush1.msra.mxu0 0.0
      %2039 = vmatprep.subr.mxu0 0.0
      %2040 = vmatpush1.msra.mxu0 0.0
      %2041 = vmatprep.subr.mxu0 0.0
      %2042 = vmatpush1.msra.mxu0 0.0
      %2043 = vmatprep.subr.mxu0 0.0
      %2044 = vmatpush1.msra.mxu0 0.0
      %2045 = vmatprep.subr.mxu0 0.0
      %2046 = vmatpush1.msra.mxu0 0.0
      %2047 = vmatprep.subr.mxu0 0.0
      %2048 = vmatpush1.msra.mxu0 0.0
      %2049 = vmatprep.subr.mxu0 0.0
      %2050 = vmatpush1.msra.mxu0 0.0
      %2051 = vmatprep.subr.mxu0 0.0
      %2052 = vmatpush1.msra.mxu0 0.0
      %2053 = vmatprep.subr.mxu0 0.0
      %2054 = vmatpush1.msra.mxu0 0.0
      %2055 = vmatprep.subr.mxu0 0.0
      %2056 = vmatpush1.msra.mxu0 0.0
      %2057 = vmatprep.subr.mxu0 0.0
      %2058 = vmatpush1.msra.mxu0 0.0
      %2059 = vmatprep.subr.mxu0 0.0
      %2060 = vmatpush1.msra.mxu0 0.0
      %2061 = vmatprep.subr.mxu0 0.0
      %2062 = vmatpush1.msra.mxu0 0.0
      %2063 = vmatprep.subr.mxu0 0.0
      %2064 = vmatpush1.msra.mxu0 0.0
      %2065 = vmatprep.subr.mxu0 0.0
      %2066 = vmatpush1.msra.mxu0 0.0
      %2067 = vmatprep.subr.mxu0 0.0
      %2068 = vmatpush1.msra.mxu0 0.0
      %2069 = vmatprep.subr.mxu0 0.0
      %2070 = vmatpush1.msra.mxu0 0.0
      %2071 = vmatprep.subr.mxu0 0.0
      %2072 = vmatpush1.msra.mxu0 0.0
      %2073 = vmatprep.subr.mxu0 0.0
      %2074 = vmatpush1.msra.mxu0 0.0
      %2075 = vmatprep.subr.mxu0 0.0
      %2076 = vmatpush1.msra.mxu0 0.0
      %2077 = vmatprep.subr.mxu0 0.0
      %2078 = vmatpush1.msra.mxu0 0.0
      %2079 = vmatprep.mubr.f32.mxu0 0.0
      %2080 = vmatmul.mubr.f32.gmra.mrb[0].mxu0 %v866
      %v2081 = vpop.f32.mrb[0].mxu0
      %v2082 = vadd.f32 0.0, %v2081
      %v2083 = vpop.f32.mrb[0].mxu0
      %2084 = vmatprep.mubr.f32.mxu0 0.0
      %2085 = vmatmul.mubr.f32.gmra.mrb[0].mxu0 %v869
      %v2086 = vpop.f32.mrb[0].mxu0
      %v2087 = vadd.f32 0.0, %v2086
      %v2088 = vpop.f32.mrb[0].mxu0
      %2089 = vmatprep.mubr.f32.mxu0 0.0
      %2090 = vmatmul.mubr.f32.gmra.mrb[0].mxu0 %v872
      %v2091 = vpop.f32.mrb[0].mxu0
      %v2092 = vadd.f32 0.0, %v2091
      %v2093 = vpop.f32.mrb[0].mxu0
      %2094 = vmatprep.mubr.f32.mxu0 0.0
      %2095 = vmatmul.mubr.f32.gmra.mrb[0].mxu0 %v875
      %v2096 = vpop.f32.mrb[0].mxu0
      %v2097 = vadd.f32 0.0, %v2096
      %v2098 = vpop.f32.mrb[0].mxu0
      %2099 = vmatprep.mubr.f32.mxu0 0.0
      %2100 = vmatmul.mubr.f32.gmra.mrb[0].mxu0 %v878
      %v2101 = vpop.f32.mrb[0].mxu0
      %v2102 = vadd.f32 0.0, %v2101
      %v2103 = vpop.f32.mrb[0].mxu0
      %2104 = vmatprep.mubr.f32.mxu0 0.0
      %2105 = vmatmul.mubr.f32.gmra.mrb[0].mxu0 %v881
      %v2106 = vpop.f32.mrb[0].mxu0
      %v2107 = vadd.f32 0.0, %v2106
      %v2108 = vpop.f32.mrb[0].mxu0
      %2109 = vmatprep.mubr.f32.mxu0 0.0
      %2110 = vmatmul.mubr.f32.gmra.mrb[0].mxu0 %v884
      %v2111 = vpop.f32.mrb[0].mxu0
      %v2112 = vadd.f32 0.0, %v2111
      %v2113 = vpop.f32.mrb[0].mxu0
      %2114 = vmatprep.mubr.f32.mxu0 0.0
      %2115 = vmatmul.mubr.f32.gmra.mrb[0].mxu0 %v887
      %v2116 = vpop.f32.mrb[0].mxu0
      %v2117 = vadd.f32 0.0, %v2116
      %v2118 = vpop.f32.mrb[0].mxu0
      %2119 = vdwg.mxu0
      %v2120 = vadd.f32 %v2007, %v2082
      %v2121 = vadd.f32 %v2008, %v2087
      %v2122 = vadd.f32 %v2009, %v2092
      %v2123 = vadd.f32 %v2010, %v2097
      %v2124 = vadd.f32 %v2011, %v2102
      %v2125 = vadd.f32 %v2012, %v2107
      %v2126 = vadd.f32 %v2013, %v2112
      %v2127 = vadd.f32 %v2014, %v2117
      %v2128 = vmax.f32 %v2120, 0.0
      %v2129 = vmax.f32 %v2121, 0.0
      %v2130 = vmax.f32 %v2122, 0.0
      %v2131 = vmax.f32 %v2123, 0.0
      %v2132 = vmax.f32 %v2124, 0.0
      %v2133 = vmax.f32 %v2125, 0.0
      %v2134 = vmax.f32 %v2126, 0.0
      %v2135 = vmax.f32 %v2127, 0.0
      %v2136 = vpack.c.bf16 %v2129, %v2128
      %v2137 = vpack.c.bf16 %v2131, %v2130
      %v2138 = vpack.c.bf16 %v2133, %v2132
      %v2139 = vpack.c.bf16 %v2135, %v2134
      %v2140 = vld [vmem:[%s3] sm:$0xff]
      %v2141 = vld [vmem:[%s3 + $0x8] sm:$0xf]
      %v2142 = vld [vmem:[%s3 + $0xc] sm:$0xff]
      %v2143 = vld [vmem:[%s3 + $0x14] sm:$0xf]
      %v2144 = vld [vmem:[%s3 + $0x18] sm:$0xff]
      %v2145 = vld [vmem:[%s3 + $0x20] sm:$0xf]
      %v2146 = vld [vmem:[%s3 + $0x24] sm:$0xff]
      %v2147 = vld [vmem:[%s3 + $0x2c] sm:$0xf]
      %v2148 = vld [vmem:[%s3 + $0x30] sm:$0xff]
      %v2149 = vld [vmem:[%s3 + $0x38] sm:$0xf]
      %v2150 = vld [vmem:[%s3 + $0x3c] sm:$0xff]
      %v2151 = vld [vmem:[%s3 + $0x44] sm:$0xf]
      %v2152 = vld [vmem:[%s3 + $0x48] sm:$0xff]
      %v2153 = vld [vmem:[%s3 + $0x50] sm:$0xf]
      %v2154 = vld [vmem:[%s3 + $0x54] sm:$0xff]
      %v2155 = vld [vmem:[%s3 + $0x5c] sm:$0xf]
      %v2156 = vld [vmem:[%s3 + $0x60] sm:$0xff]
      %v2157 = vld [vmem:[%s3 + $0x68] sm:$0xf]
      %v2158 = vld [vmem:[%s3 + $0x6c] sm:$0xff]
      %v2159 = vld [vmem:[%s3 + $0x74] sm:$0xf]
      %v2160 = vld [vmem:[%s3 + $0x78] sm:$0xff]
      %v2161 = vld [vmem:[%s3 + $0x80] sm:$0xf]
      %v2162 = vld [vmem:[%s3 + $0x84] sm:$0xff]
      %v2163 = vld [vmem:[%s3 + $0x8c] sm:$0xf]
      %v2164 = vld [vmem:[%s3 + $0x90] sm:$0xff]
      %v2165 = vld [vmem:[%s3 + $0x98] sm:$0xf]
      %v2166 = vld [vmem:[%s3 + $0x9c] sm:$0xff]
      %v2167 = vld [vmem:[%s3 + $0xa4] sm:$0xf]
      %v2168 = vld [vmem:[%s3 + $0xa8] sm:$0xff]
      %v2169 = vld [vmem:[%s3 + $0xb0] sm:$0xf]
      %v2170 = vld [vmem:[%s3 + $0xb4] sm:$0xff]
      %v2171 = vld [vmem:[%s3 + $0xbc] sm:$0xf]
      %v2204 = vunpack.c.l.b16 %v2140
      %v2205 = vunpack.c.h.b16 %v2140
      %v2206 = vunpack.c.l.b16 %v2141
      %v2207 = vunpack.c.l.b16 %v2142
      %v2208 = vunpack.c.h.b16 %v2142
      %v2209 = vunpack.c.l.b16 %v2143
      %v2210 = vunpack.c.l.b16 %v2144
      %v2211 = vunpack.c.h.b16 %v2144
      %v2212 = vunpack.c.l.b16 %v2145
      %v2213 = vunpack.c.l.b16 %v2146
      %v2214 = vunpack.c.h.b16 %v2146
      %v2215 = vunpack.c.l.b16 %v2147
      %v2216 = vunpack.c.l.b16 %v2148
      %v2217 = vunpack.c.h.b16 %v2148
      %v2218 = vunpack.c.l.b16 %v2149
      %v2219 = vunpack.c.l.b16 %v2150
      %v2220 = vunpack.c.h.b16 %v2150
      %v2221 = vunpack.c.l.b16 %v2151
      %v2222 = vunpack.c.l.b16 %v2152
      %v2223 = vunpack.c.h.b16 %v2152
      %v2224 = vunpack.c.l.b16 %v2153
      %v2225 = vunpack.c.l.b16 %v2154
      %v2226 = vunpack.c.h.b16 %v2154
      %v2227 = vunpack.c.l.b16 %v2155
      %v2228 = vunpack.c.l.b16 %v2156
      %v2229 = vunpack.c.h.b16 %v2156
      %v2230 = vunpack.c.l.b16 %v2157
      %v2231 = vunpack.c.l.b16 %v2158
      %v2232 = vunpack.c.h.b16 %v2158
      %v2233 = vunpack.c.l.b16 %v2159
      %v2234 = vunpack.c.l.b16 %v2160
      %v2235 = vunpack.c.h.b16 %v2160
      %v2236 = vunpack.c.l.b16 %v2161
      %v2237 = vunpack.c.l.b16 %v2162
      %v2238 = vunpack.c.h.b16 %v2162
      %v2239 = vunpack.c.l.b16 %v2163
      %v2240 = vunpack.c.l.b16 %v2164
      %v2241 = vunpack.c.h.b16 %v2164
      %v2242 = vunpack.c.l.b16 %v2165
      %v2243 = vunpack.c.l.b16 %v2166
      %v2244 = vunpack.c.h.b16 %v2166
      %v2245 = vunpack.c.l.b16 %v2167
      %v2246 = vunpack.c.l.b16 %v2168
      %v2247 = vunpack.c.h.b16 %v2168
      %v2248 = vunpack.c.l.b16 %v2169
      %v2249 = vunpack.c.l.b16 %v2170
      %v2250 = vunpack.c.h.b16 %v2170
      %v2251 = vunpack.c.l.b16 %v2171
      %v2252 = vpack.c.b16 %v2207, %v2204
      %v2253 = vpack.c.b16 %v2208, %v2205
      %v2254 = vpack.c.b16 %v2209, %v2206
      %v2255 = vpack.c.b16 %v2213, %v2210
      %v2256 = vpack.c.b16 %v2214, %v2211
      %v2257 = vpack.c.b16 %v2215, %v2212
      %v2258 = vpack.c.b16 %v2219, %v2216
      %v2259 = vpack.c.b16 %v2220, %v2217
      %v2260 = vpack.c.b16 %v2221, %v2218
      %v2261 = vpack.c.b16 %v2225, %v2222
      %v2262 = vpack.c.b16 %v2226, %v2223
      %v2263 = vpack.c.b16 %v2227, %v2224
      %v2264 = vpack.c.b16 %v2231, %v2228
      %v2265 = vpack.c.b16 %v2232, %v2229
      %v2266 = vpack.c.b16 %v2233, %v2230
      %v2267 = vpack.c.b16 %v2237, %v2234
      %v2268 = vpack.c.b16 %v2238, %v2235
      %v2269 = vpack.c.b16 %v2239, %v2236
      %v2270 = vpack.c.b16 %v2243, %v2240
      %v2271 = vpack.c.b16 %v2244, %v2241
      %v2272 = vpack.c.b16 %v2245, %v2242
      %v2273 = vpack.c.b16 %v2249, %v2246
      %v2274 = vpack.c.b16 %v2250, %v2247
      %v2275 = vpack.c.b16 %v2251, %v2248
      %2300 = vmatprep.subr.bf16.mxu0 %v2253
      %2301 = vmatpush1.bf16.msra.mxu0 %v2252
      %2302 = vmatprep.subr.bf16.mxu0 %v2256
      %2303 = vmatpush1.bf16.msra.mxu0 %v2255
      %2304 = vmatprep.subr.bf16.mxu0 %v2259
      %2305 = vmatpush1.bf16.msra.mxu0 %v2258
      %2306 = vmatprep.subr.bf16.mxu0 %v2262
      %2307 = vmatpush1.bf16.msra.mxu0 %v2261
      %2308 = vmatprep.subr.bf16.mxu0 %v2265
      %2309 = vmatpush1.bf16.msra.mxu0 %v2264
      %2310 = vmatprep.subr.bf16.mxu0 %v2268
      %2311 = vmatpush1.bf16.msra.mxu0 %v2267
      %2312 = vmatprep.subr.bf16.mxu0 %v2271
      %2313 = vmatpush1.bf16.msra.mxu0 %v2270
      %2314 = vmatprep.subr.bf16.mxu0 %v2274
      %2315 = vmatpush1.bf16.msra.mxu0 %v2273
      %2316 = vmatprep.subr.bf16.mxu0 0
      %2317 = vmatpush1.bf16.msra.mxu0 0
      %2318 = vmatprep.subr.bf16.mxu0 0
      %2319 = vmatpush1.bf16.msra.mxu0 0
      %2320 = vmatprep.subr.bf16.mxu0 0
      %2321 = vmatpush1.bf16.msra.mxu0 0
      %2322 = vmatprep.subr.bf16.mxu0 0
      %2323 = vmatpush1.bf16.msra.mxu0 0
      %2324 = vmatprep.subr.bf16.mxu0 0
      %2325 = vmatpush1.bf16.msra.mxu0 0
      %2326 = vmatprep.subr.bf16.mxu0 0
      %2327 = vmatpush1.bf16.msra.mxu0 0
      %2328 = vmatprep.subr.bf16.mxu0 0
      %2329 = vmatpush1.bf16.msra.mxu0 0
      %2330 = vmatprep.subr.bf16.mxu0 0
      %2331 = vmatpush1.bf16.msra.mxu0 0
      %2332 = vmatprep.mubr.bf16.mxu0 0
      %2333 = vmatmul.mubr.bf16.gmra.mrb[0].mxu0 %v2136
      %v2334 = vpop.f32.mrb[0].mxu0
      %v2335 = vadd.f32 0.0, %v2334
      %v2336 = vpop.f32.mrb[0].mxu0
      %v2337 = vadd.f32 0.0, %v2336
      %v2338 = vpop.f32.mrb[0].mxu0
      %v2339 = vadd.f32 0.0, %v2338
      %v2340 = vpop.f32.mrb[0].mxu0
      %v2341 = vadd.f32 0.0, %v2340
      %2342 = vmatprep.mubr.bf16.mxu0 0
      %2343 = vmatmul.mubr.bf16.gmra.mrb[0].mxu0 %v2137
      %v2344 = vpop.f32.mrb[0].mxu0
      %v2345 = vadd.f32 0.0, %v2344
      %v2346 = vpop.f32.mrb[0].mxu0
      %v2347 = vadd.f32 0.0, %v2346
      %v2348 = vpop.f32.mrb[0].mxu0
      %v2349 = vadd.f32 0.0, %v2348
      %v2350 = vpop.f32.mrb[0].mxu0
      %v2351 = vadd.f32 0.0, %v2350
      %2352 = vmatprep.mubr.bf16.mxu0 0
      %2353 = vmatmul.mubr.bf16.gmra.mrb[0].mxu0 %v2138
      %v2354 = vpop.f32.mrb[0].mxu0
      %v2355 = vadd.f32 0.0, %v2354
      %v2356 = vpop.f32.mrb[0].mxu0
      %v2357 = vadd.f32 0.0, %v2356
      %v2358 = vpop.f32.mrb[0].mxu0
      %v2359 = vadd.f32 0.0, %v2358
      %v2360 = vpop.f32.mrb[0].mxu0
      %v2361 = vadd.f32 0.0, %v2360
      %2362 = vmatprep.mubr.bf16.mxu0 0
      %2363 = vmatmul.mubr.bf16.gmra.mrb[0].mxu0 %v2139
      %v2364 = vpop.f32.mrb[0].mxu0
      %v2365 = vadd.f32 0.0, %v2364
      %v2366 = vpop.f32.mrb[0].mxu0
      %v2367 = vadd.f32 0.0, %v2366
      %v2368 = vpop.f32.mrb[0].mxu0
      %v2369 = vadd.f32 0.0, %v2368
      %v2370 = vpop.f32.mrb[0].mxu0
      %v2371 = vadd.f32 0.0, %v2370
      %2372 = vdwg.mxu0
      %2373 = vmatprep.subr.bf16.mxu0 0
      %2374 = vmatpush1.bf16.msra.mxu0 %v2254
      %2375 = vmatprep.subr.bf16.mxu0 0
      %2376 = vmatpush1.bf16.msra.mxu0 %v2257
      %2377 = vmatprep.subr.bf16.mxu0 0
      %2378 = vmatpush1.bf16.msra.mxu0 %v2260
      %2379 = vmatprep.subr.bf16.mxu0 0
      %2380 = vmatpush1.bf16.msra.mxu0 %v2263
      %2381 = vmatprep.subr.bf16.mxu0 0
      %2382 = vmatpush1.bf16.msra.mxu0 %v2266
      %2383 = vmatprep.subr.bf16.mxu0 0
      %2384 = vmatpush1.bf16.msra.mxu0 %v2269
      %2385 = vmatprep.subr.bf16.mxu0 0
      %2386 = vmatpush1.bf16.msra.mxu0 %v2272
      %2387 = vmatprep.subr.bf16.mxu0 0
      %2388 = vmatpush1.bf16.msra.mxu0 %v2275
      %2389 = vmatprep.subr.bf16.mxu0 0
      %2390 = vmatpush1.bf16.msra.mxu0 0
      %2391 = vmatprep.subr.bf16.mxu0 0
      %2392 = vmatpush1.bf16.msra.mxu0 0
      %2393 = vmatprep.subr.bf16.mxu0 0
      %2394 = vmatpush1.bf16.msra.mxu0 0
      %2395 = vmatprep.subr.bf16.mxu0 0
      %2396 = vmatpush1.bf16.msra.mxu0 0
      %2397 = vmatprep.subr.bf16.mxu0 0
      %2398 = vmatpush1.bf16.msra.mxu0 0
      %2399 = vmatprep.subr.bf16.mxu0 0
      %2400 = vmatpush1.bf16.msra.mxu0 0
      %2401 = vmatprep.subr.bf16.mxu0 0
      %2402 = vmatpush1.bf16.msra.mxu0 0
      %2403 = vmatprep.subr.bf16.mxu0 0
      %2404 = vmatpush1.bf16.msra.mxu0 0
      %2405 = vmatprep.mubr.bf16.mxu0 0
      %2406 = vmatmul.mubr.bf16.gmra.mrb[0].mxu0 %v2136
      %v2407 = vpop.f32.mrb[0].mxu0
      %v2408 = vadd.f32 0.0, %v2407
      %v2409 = vpop.f32.mrb[0].mxu0
      %v2410 = vpop.f32.mrb[0].mxu0
      %v2411 = vadd.f32 0.0, %v2410
      %v2412 = vpop.f32.mrb[0].mxu0
      %2413 = vmatprep.mubr.bf16.mxu0 0
      %2414 = vmatmul.mubr.bf16.gmra.mrb[0].mxu0 %v2137
      %v2415 = vpop.f32.mrb[0].mxu0
      %v2416 = vadd.f32 0.0, %v2415
      %v2417 = vpop.f32.mrb[0].mxu0
      %v2418 = vpop.f32.mrb[0].mxu0
      %v2419 = vadd.f32 0.0, %v2418
      %v2420 = vpop.f32.mrb[0].mxu0
      %2421 = vmatprep.mubr.bf16.mxu0 0
      %2422 = vmatmul.mubr.bf16.gmra.mrb[0].mxu0 %v2138
      %v2423 = vpop.f32.mrb[0].mxu0
      %v2424 = vadd.f32 0.0, %v2423
      %v2425 = vpop.f32.mrb[0].mxu0
      %v2426 = vpop.f32.mrb[0].mxu0
      %v2427 = vadd.f32 0.0, %v2426
      %v2428 = vpop.f32.mrb[0].mxu0
      %2429 = vmatprep.mubr.bf16.mxu0 0
      %2430 = vmatmul.mubr.bf16.gmra.mrb[0].mxu0 %v2139
      %v2431 = vpop.f32.mrb[0].mxu0
      %v2432 = vadd.f32 0.0, %v2431
      %v2433 = vpop.f32.mrb[0].mxu0
      %v2434 = vpop.f32.mrb[0].mxu0
      %v2435 = vadd.f32 0.0, %v2434
      %v2436 = vpop.f32.mrb[0].mxu0
      %2437 = vdwg.mxu0
      %v2438 = vld [vmem:[%s4] sm:$0x1]
      %v2440 = vlaneseq
      %v2441 = vshrl.u32 %v2440, 7
      %v2442 = vsub.s32 0, %v2441
      %v2443 = vrot.slane %v2438, %v2442
      %v2445 = vadd.f32 %v2337, %v2443
      %v2446 = vadd.f32 %v2341, %v2443
      %v2447 = vadd.f32 %v2347, %v2443
      %v2448 = vadd.f32 %v2351, %v2443
      %v2449 = vadd.f32 %v2357, %v2443
      %v2450 = vadd.f32 %v2361, %v2443
      %v2451 = vadd.f32 %v2367, %v2443
      %v2452 = vadd.f32 %v2371, %v2443
      %2453 = vmatprep.subr.mxu0 0.0
      %2454 = vmatpush1.msra.mxu0 %v2335
      %2455 = vmatprep.subr.mxu0 0.0
      %2456 = vmatpush1.msra.mxu0 %v2339
      %2457 = vmatprep.subr.mxu0 0.0
      %2458 = vmatpush1.msra.mxu0 %v2345
      %2459 = vmatprep.subr.mxu0 0.0
      %2460 = vmatpush1.msra.mxu0 %v2349
      %2461 = vmatprep.subr.mxu0 0.0
      %2462 = vmatpush1.msra.mxu0 %v2355
      %2463 = vmatprep.subr.mxu0 0.0
      %2464 = vmatpush1.msra.mxu0 %v2359
      %2465 = vmatprep.subr.mxu0 0.0
      %2466 = vmatpush1.msra.mxu0 %v2365
      %2467 = vmatprep.subr.mxu0 0.0
      %2468 = vmatpush1.msra.mxu0 %v2369
      %2469 = vmatprep.subr.mxu0 0.0
      %2470 = vmatpush1.msra.mxu0 0.0
      %2471 = vmatprep.subr.mxu0 0.0
      %2472 = vmatpush1.msra.mxu0 0.0
      %2473 = vmatprep.subr.mxu0 0.0
      %2474 = vmatpush1.msra.mxu0 0.0
      %2475 = vmatprep.subr.mxu0 0.0
      %2476 = vmatpush1.msra.mxu0 0.0
      %2477 = vmatprep.subr.mxu0 0.0
      %2478 = vmatpush1.msra.mxu0 0.0
      %2479 = vmatprep.subr.mxu0 0.0
      %2480 = vmatpush1.msra.mxu0 0.0
      %2481 = vmatprep.subr.mxu0 0.0
      %2482 = vmatpush1.msra.mxu0 0.0
      %2483 = vmatprep.subr.mxu0 0.0
      %2484 = vmatpush1.msra.mxu0 0.0
      %2485 = vmatprep.subr.mxu0 0.0
      %2486 = vmatpush1.msra.mxu0 0.0
      %2487 = vmatprep.subr.mxu0 0.0
      %2488 = vmatpush1.msra.mxu0 0.0
      %2489 = vmatprep.subr.mxu0 0.0
      %2490 = vmatpush1.msra.mxu0 0.0
      %2491 = vmatprep.subr.mxu0 0.0
      %2492 = vmatpush1.msra.mxu0 0.0
      %2493 = vmatprep.subr.mxu0 0.0
      %2494 = vmatpush1.msra.mxu0 0.0
      %2495 = vmatprep.subr.mxu0 0.0
      %2496 = vmatpush1.msra.mxu0 0.0
      %2497 = vmatprep.subr.mxu0 0.0
      %2498 = vmatpush1.msra.mxu0 0.0
      %2499 = vmatprep.subr.mxu0 0.0
      %2500 = vmatpush1.msra.mxu0 0.0
      %2501 = vmatprep.subr.mxu0 0.0
      %2502 = vmatpush1.msra.mxu0 0.0
      %2503 = vmatprep.subr.mxu0 0.0
      %2504 = vmatpush1.msra.mxu0 0.0
      %2505 = vmatprep.subr.mxu0 0.0
      %2506 = vmatpush1.msra.mxu0 0.0
      %2507 = vmatprep.subr.mxu0 0.0
      %2508 = vmatpush1.msra.mxu0 0.0
      %2509 = vmatprep.subr.mxu0 0.0
      %2510 = vmatpush1.msra.mxu0 0.0
      %2511 = vmatprep.subr.mxu0 0.0
      %2512 = vmatpush1.msra.mxu0 0.0
      %2513 = vmatprep.subr.mxu0 0.0
      %2514 = vmatpush1.msra.mxu0 0.0
      %2515 = vmatprep.subr.mxu0 0.0
      %2516 = vmatpush1.msra.mxu0 0.0
      %2517 = vmatprep.mubr.f32.mxu0 0.0
      %2518 = vmatmul.mubr.f32.gmra.mrb[0].mxu0 %v729
      %v2519 = vpop.f32.mrb[0].mxu0
      %v2520 = vadd.f32 0.0, %v2519
      %v2521 = vpop.f32.mrb[0].mxu0
      %2522 = vmatprep.mubr.f32.mxu0 0.0
      %2523 = vmatmul.mubr.f32.gmra.mrb[0].mxu0 %v732
      %v2524 = vpop.f32.mrb[0].mxu0
      %v2525 = vadd.f32 0.0, %v2524
      %v2526 = vpop.f32.mrb[0].mxu0
      %2527 = vmatprep.mubr.f32.mxu0 0.0
      %2528 = vmatmul.mubr.f32.gmra.mrb[0].mxu0 %v735
      %v2529 = vpop.f32.mrb[0].mxu0
      %v2530 = vadd.f32 0.0, %v2529
      %v2531 = vpop.f32.mrb[0].mxu0
      %2532 = vmatprep.mubr.f32.mxu0 0.0
      %2533 = vmatmul.mubr.f32.gmra.mrb[0].mxu0 %v738
      %v2534 = vpop.f32.mrb[0].mxu0
      %v2535 = vadd.f32 0.0, %v2534
      %v2536 = vpop.f32.mrb[0].mxu0
      %2537 = vmatprep.mubr.f32.mxu0 0.0
      %2538 = vmatmul.mubr.f32.gmra.mrb[0].mxu0 %v741
      %v2539 = vpop.f32.mrb[0].mxu0
      %v2540 = vadd.f32 0.0, %v2539
      %v2541 = vpop.f32.mrb[0].mxu0
      %2542 = vmatprep.mubr.f32.mxu0 0.0
      %2543 = vmatmul.mubr.f32.gmra.mrb[0].mxu0 %v744
      %v2544 = vpop.f32.mrb[0].mxu0
      %v2545 = vadd.f32 0.0, %v2544
      %v2546 = vpop.f32.mrb[0].mxu0
      %2547 = vmatprep.mubr.f32.mxu0 0.0
      %2548 = vmatmul.mubr.f32.gmra.mrb[0].mxu0 %v747
      %v2549 = vpop.f32.mrb[0].mxu0
      %v2550 = vadd.f32 0.0, %v2549
      %v2551 = vpop.f32.mrb[0].mxu0
      %2552 = vmatprep.mubr.f32.mxu0 0.0
      %2553 = vmatmul.mubr.f32.gmra.mrb[0].mxu0 %v750
      %v2554 = vpop.f32.mrb[0].mxu0
      %v2555 = vadd.f32 0.0, %v2554
      %v2556 = vpop.f32.mrb[0].mxu0
      %2557 = vdwg.mxu0
      %v2558 = vadd.f32 %v2445, %v2520
      %v2559 = vadd.f32 %v2446, %v2525
      %v2560 = vadd.f32 %v2447, %v2530
      %v2561 = vadd.f32 %v2448, %v2535
      %v2562 = vadd.f32 %v2449, %v2540
      %v2563 = vadd.f32 %v2450, %v2545
      %v2564 = vadd.f32 %v2451, %v2550
      %v2565 = vadd.f32 %v2452, %v2555
      %2566 = vmatprep.subr.mxu0 0.0
      %2567 = vmatpush1.msra.mxu0 %v2408
      %2568 = vmatprep.subr.mxu0 0.0
      %2569 = vmatpush1.msra.mxu0 %v2411
      %2570 = vmatprep.subr.mxu0 0.0
      %2571 = vmatpush1.msra.mxu0 %v2416
      %2572 = vmatprep.subr.mxu0 0.0
      %2573 = vmatpush1.msra.mxu0 %v2419
      %2574 = vmatprep.subr.mxu0 0.0
      %2575 = vmatpush1.msra.mxu0 %v2424
      %2576 = vmatprep.subr.mxu0 0.0
      %2577 = vmatpush1.msra.mxu0 %v2427
      %2578 = vmatprep.subr.mxu0 0.0
      %2579 = vmatpush1.msra.mxu0 %v2432
      %2580 = vmatprep.subr.mxu0 0.0
      %2581 = vmatpush1.msra.mxu0 %v2435
      %2582 = vmatprep.subr.mxu0 0.0
      %2583 = vmatpush1.msra.mxu0 0.0
      %2584 = vmatprep.subr.mxu0 0.0
      %2585 = vmatpush1.msra.mxu0 0.0
      %2586 = vmatprep.subr.mxu0 0.0
      %2587 = vmatpush1.msra.mxu0 0.0
      %2588 = vmatprep.subr.mxu0 0.0
      %2589 = vmatpush1.msra.mxu0 0.0
      %2590 = vmatprep.subr.mxu0 0.0
      %2591 = vmatpush1.msra.mxu0 0.0
      %2592 = vmatprep.subr.mxu0 0.0
      %2593 = vmatpush1.msra.mxu0 0.0
      %2594 = vmatprep.subr.mxu0 0.0
      %2595 = vmatpush1.msra.mxu0 0.0
      %2596 = vmatprep.subr.mxu0 0.0
      %2597 = vmatpush1.msra.mxu0 0.0
      %2598 = vmatprep.subr.mxu0 0.0
      %2599 = vmatpush1.msra.mxu0 0.0
      %2600 = vmatprep.subr.mxu0 0.0
      %2601 = vmatpush1.msra.mxu0 0.0
      %2602 = vmatprep.subr.mxu0 0.0
      %2603 = vmatpush1.msra.mxu0 0.0
      %2604 = vmatprep.subr.mxu0 0.0
      %2605 = vmatpush1.msra.mxu0 0.0
      %2606 = vmatprep.subr.mxu0 0.0
      %2607 = vmatpush1.msra.mxu0 0.0
      %2608 = vmatprep.subr.mxu0 0.0
      %2609 = vmatpush1.msra.mxu0 0.0
      %2610 = vmatprep.subr.mxu0 0.0
      %2611 = vmatpush1.msra.mxu0 0.0
      %2612 = vmatprep.subr.mxu0 0.0
      %2613 = vmatpush1.msra.mxu0 0.0
      %2614 = vmatprep.subr.mxu0 0.0
      %2615 = vmatpush1.msra.mxu0 0.0
      %2616 = vmatprep.subr.mxu0 0.0
      %2617 = vmatpush1.msra.mxu0 0.0
      %2618 = vmatprep.subr.mxu0 0.0
      %2619 = vmatpush1.msra.mxu0 0.0
      %2620 = vmatprep.subr.mxu0 0.0
      %2621 = vmatpush1.msra.mxu0 0.0
      %2622 = vmatprep.subr.mxu0 0.0
      %2623 = vmatpush1.msra.mxu0 0.0
      %2624 = vmatprep.subr.mxu0 0.0
      %2625 = vmatpush1.msra.mxu0 0.0
      %2626 = vmatprep.subr.mxu0 0.0
      %2627 = vmatpush1.msra.mxu0 0.0
      %2628 = vmatprep.subr.mxu0 0.0
      %2629 = vmatpush1.msra.mxu0 0.0
      %2630 = vmatprep.mubr.f32.mxu0 0.0
      %2631 = vmatmul.mubr.f32.gmra.mrb[0].mxu0 %v866
      %v2632 = vpop.f32.mrb[0].mxu0
      %v2633 = vadd.f32 0.0, %v2632
      %v2634 = vpop.f32.mrb[0].mxu0
      %2635 = vmatprep.mubr.f32.mxu0 0.0
      %2636 = vmatmul.mubr.f32.gmra.mrb[0].mxu0 %v869
      %v2637 = vpop.f32.mrb[0].mxu0
      %v2638 = vadd.f32 0.0, %v2637
      %v2639 = vpop.f32.mrb[0].mxu0
      %2640 = vmatprep.mubr.f32.mxu0 0.0
      %2641 = vmatmul.mubr.f32.gmra.mrb[0].mxu0 %v872
      %v2642 = vpop.f32.mrb[0].mxu0
      %v2643 = vadd.f32 0.0, %v2642
      %v2644 = vpop.f32.mrb[0].mxu0
      %2645 = vmatprep.mubr.f32.mxu0 0.0
      %2646 = vmatmul.mubr.f32.gmra.mrb[0].mxu0 %v875
      %v2647 = vpop.f32.mrb[0].mxu0
      %v2648 = vadd.f32 0.0, %v2647
      %v2649 = vpop.f32.mrb[0].mxu0
      %2650 = vmatprep.mubr.f32.mxu0 0.0
      %2651 = vmatmul.mubr.f32.gmra.mrb[0].mxu0 %v878
      %v2652 = vpop.f32.mrb[0].mxu0
      %v2653 = vadd.f32 0.0, %v2652
      %v2654 = vpop.f32.mrb[0].mxu0
      %2655 = vmatprep.mubr.f32.mxu0 0.0
      %2656 = vmatmul.mubr.f32.gmra.mrb[0].mxu0 %v881
      %v2657 = vpop.f32.mrb[0].mxu0
      %v2658 = vadd.f32 0.0, %v2657
      %v2659 = vpop.f32.mrb[0].mxu0
      %2660 = vmatprep.mubr.f32.mxu0 0.0
      %2661 = vmatmul.mubr.f32.gmra.mrb[0].mxu0 %v884
      %v2662 = vpop.f32.mrb[0].mxu0
      %v2663 = vadd.f32 0.0, %v2662
      %v2664 = vpop.f32.mrb[0].mxu0
      %2665 = vmatprep.mubr.f32.mxu0 0.0
      %2666 = vmatmul.mubr.f32.gmra.mrb[0].mxu0 %v887
      %v2667 = vpop.f32.mrb[0].mxu0
      %v2668 = vadd.f32 0.0, %v2667
      %v2669 = vpop.f32.mrb[0].mxu0
      %2670 = vdwg.mxu0
      %v2671 = vadd.f32 %v2558, %v2633
      %v2672 = vadd.f32 %v2559, %v2638
      %v2673 = vadd.f32 %v2560, %v2643
      %v2674 = vadd.f32 %v2561, %v2648
      %v2675 = vadd.f32 %v2562, %v2653
      %v2676 = vadd.f32 %v2563, %v2658
      %v2677 = vadd.f32 %v2564, %v2663
      %v2678 = vadd.f32 %v2565, %v2668
      %v2679 = vadd.f32 %v2671, %v1577
      %v2680 = vadd.f32 %v2672, %v1578
      %v2681 = vadd.f32 %v2673, %v1579
      %v2682 = vadd.f32 %v2674, %v1580
      %v2683 = vadd.f32 %v2675, %v1581
      %v2684 = vadd.f32 %v2676, %v1582
      %v2685 = vadd.f32 %v2677, %v1583
      %v2686 = vadd.f32 %v2678, %v1584
      %v2687 = vmax.f32 %v2679, 0.0
      %v2688 = vmax.f32 %v2680, 0.0
      %v2689 = vmax.f32 %v2681, 0.0
      %v2690 = vmax.f32 %v2682, 0.0
      %v2691 = vmax.f32 %v2683, 0.0
      %v2692 = vmax.f32 %v2684, 0.0
      %v2693 = vmax.f32 %v2685, 0.0
      %v2694 = vmax.f32 %v2686, 0.0
      %2695 = vst [vmem:[%s226 + $0x40] sm:$0xff] %v2687
      %2696 = vst [vmem:[%s226 + $0x48] sm:$0xff] %v2688
      %2697 = vst [vmem:[%s226 + $0x50] sm:$0xff] %v2689
      %2698 = vst [vmem:[%s226 + $0x58] sm:$0xff] %v2690
      %2699 = vst [vmem:[%s226 + $0x60] sm:$0xff] %v2691
      %2700 = vst [vmem:[%s226 + $0x68] sm:$0xff] %v2692
      %2701 = vst [vmem:[%s226 + $0x70] sm:$0xff] %v2693
      %2702 = vst [vmem:[%s226 + $0x78] sm:$0xff] %v2694
      %s2703 = smul.u32 16, %s16
      %p2704 = scmp.lt.s32.totalorder %s2703, 31
      %s2705 = scalar_select %p2704, %s2703, 31
      %s2706 = smul.addr %s2705, 8
      %s2707 = scalar_lea.vmem %s5, %s2706
      // Predicated region
      $region41: #{basic_block_forward.1} parent=39 // pred_check
        %p2708 = pneg %p144
      $region42: #{basic_block_forward.1} parent=39 // pred_check_branch
        %2710 = sbr.rel (%p2708) target = $region44
      $region43: #{basic_block_forward.1} parent=39 // pred_region
        %s2711 = smul.u32 16, %s16
      $region44: #{basic_block_forward.1} parent=39 // pred_fallthru
        _
    $region40: #{basic_block_forward.1} parent=5 // pred_fallthru
      _
    %p2712 = scmp.le.s32.totalorder 2, %s11
    // Predicated region
    $region45: #{basic_block_forward.1} parent=5 // pred_check
      %p2713 = pneg %p2712
    $region46: #{basic_block_forward.1} parent=5 // pred_check_branch
      %2715 = sbr.rel (%p2713) target = $region48
    $region47: #{basic_block_forward.1} parent=5 // pred_region
      %s2716 = ssub.s32 %s11, 2
      // Predicated region
      $region49: #{basic_block_forward.1} parent=47 // pred_check
        %p2717 = pneg %p150
      $region50: #{basic_block_forward.1} parent=47 // pred_check_branch
        %2719 = sbr.rel (%p2717) target = $region52
      $region51: #{basic_block_forward.1} parent=47 // pred_region
        %s2720 = smul.u32 16, %s17
        %p2721 = scmp.lt.s32.totalorder %s2720, 31
        %s2722 = scalar_select %p2721, %s2720, 31
        %s2723 = smul.addr %s2722, 8
        %s2724 = scalar_lea.vmem %s5, %s2723
      $region52: #{basic_block_forward.1} parent=47 // pred_fallthru
        _
    $region48: #{basic_block_forward.1} parent=5 // pred_fallthru
      _
  $region6: #{basic_block_forward.1} parent=0 // loop_footer
    %s15 = sadd.s32 1, %s11
  $region7: #{basic_block_forward.1} parent=0 // loop_footer_branch
    %10 = sbr.rel target = $region3
  $region8: #{basic_block_forward.1} parent=0 // loop_exit
    _

</llo_original>
